<compile_context>
chip_gen: v7x
topology: tpu7x:2x2x1
jax: 0.10.0
libtpu: 0.0.40
codegen_flags: <defaults>
</compile_context>

<pallas_src>
import math

import jax
import jax.numpy as jnp
from jax import lax
from jax.experimental import pallas as pl
from jax.experimental.pallas import tpu as pltpu


def _make_dpd_kernel(cell, gamma_parallel, gamma_transverse, boltzman,
                     T, dt, mass0, n_real, tile_m, tile_n):
    cx, cy, cz = float(cell[0]), float(cell[1]), float(cell[2])
    c = (cx, cy, cz)
    inv_c = (1.0 / cx, 1.0 / cy, 1.0 / cz)
    gpar = float(gamma_parallel)
    gtr = float(gamma_transverse)
    # Langevin coefficients (already divided by dt, as in the torch module).
    cpar_dt = math.sqrt(2.0 * gpar / mass0 * boltzman * T * dt) / dt
    ctr_dt = math.sqrt(2.0) * math.sqrt(2.0 * gtr / mass0 * boltzman * T * dt) / dt

    def kernel(qc_ref, qrT_ref, vc_ref, vrT_ref, xip_ref, xit_ref, o_ref,
               acc_x, acc_y, acc_z):
        j_step = pl.program_id(1)

        @pl.when(j_step == 0)
        def _():
            acc_x[...] = jnp.zeros_like(acc_x)
            acc_y[...] = jnp.zeros_like(acc_y)
            acc_z[...] = jnp.zeros_like(acc_z)

        qc = qc_ref[...]    # (TM, 3) row-atom positions
        qr = qrT_ref[...]   # (3, TN) col-atom positions (pre-transposed)
        vc = vc_ref[...]    # (TM, 3) row-atom velocities
        vr = vrT_ref[...]   # (3, TN) col-atom velocities (pre-transposed)

        def mic(k):
            d = qc[:, k:k + 1] - qr[k:k + 1, :]          # (TM, TN) via broadcast
            return d - c[k] * jnp.round(d * inv_c[k])    # minimum image, no div

        dx = mic(0)
        dy = mic(1)
        dz = mic(2)
        r2 = dx * dx + dy * dy + dz * dz

        row0 = pl.program_id(0) * tile_m
        col0 = j_step * tile_n
        i_idx = row0 + lax.broadcasted_iota(jnp.int32, (tile_m, tile_n), 0)
        j_idx = col0 + lax.broadcasted_iota(jnp.int32, (tile_m, tile_n), 1)
        mask = (i_idx != j_idx) & (i_idx < n_real) & (j_idx < n_real)

        inv_r = lax.rsqrt(jnp.where(mask, r2, 1.0))      # EUP, no sqrt+div
        ux = dx * inv_r
        uy = dy * inv_r
        uz = dz * inv_r

        vx = vc[:, 0:1] - vr[0:1, :]
        vy = vc[:, 1:2] - vr[1:2, :]
        vz = vc[:, 2:3] - vr[2:3, :]

        vdotu = vx * ux + vy * uy + vz * uz
        vpx = vdotu * ux
        vpy = vdotu * uy
        vpz = vdotu * uz
        vtx = vx - vpx
        vty = vy - vpy
        vtz = vz - vpz

        tn2 = vtx * vtx + vty * vty + vtz * vtz
        inv_tn = lax.rsqrt(jnp.where(mask, tn2, 1.0))

        # friction + random, fused:
        #   F = xi_par*C_par/dt * u  +  (xi_tr*C_tr/dt/|v_t| - g_tr) * v_t  -  g_par * v_par
        a_par = xip_ref[...] * cpar_dt
        a_tr = xit_ref[...] * ctr_dt * inv_tn - gtr
        mf = mask.astype(jnp.float32)

        f_x = (a_par * ux + a_tr * vtx - gpar * vpx) * mf
        f_y = (a_par * uy + a_tr * vty - gpar * vpy) * mf
        f_z = (a_par * uz + a_tr * vtz - gpar * vpz) * mf

        # lane-dense accumulation; cross-lane reduce deferred to the last col tile
        acc_x[...] += f_x
        acc_y[...] += f_y
        acc_z[...] += f_z

        @pl.when(j_step == pl.num_programs(1) - 1)
        def _():
            o_ref[:, 0:1] = jnp.sum(acc_x[...], axis=-1, keepdims=True)
            o_ref[:, 1:2] = jnp.sum(acc_y[...], axis=-1, keepdims=True)
            o_ref[:, 2:3] = jnp.sum(acc_z[...], axis=-1, keepdims=True)

    return kernel


def dpd_pallas(q, v, xi_par, xi_trans, cell, T, dt, mass0,
               gamma_parallel=0.1, gamma_transverse=0.1,
               boltzman=0.001987191, tile_m=128, tile_n=128):
    """Equivalent of DPD(cell, ...).forward(q, v, T, dt, mass) -> (N, 3) delta_v."""
    n = q.shape[0]
    assert q.shape == (n, 3) and v.shape == (n, 3)
    assert xi_par.shape == (n, n) and xi_trans.shape == (n, n)

    q = q.astype(jnp.float32)
    v = v.astype(jnp.float32)
    xi_par = xi_par.astype(jnp.float32)
    xi_trans = xi_trans.astype(jnp.float32)

    mult = math.lcm(tile_m, tile_n)
    n_pad = ((n + mult - 1) // mult) * mult
    pad = n_pad - n
    if pad:
        q = jnp.pad(q, ((0, pad), (0, 0)))
        v = jnp.pad(v, ((0, pad), (0, 0)))
        xi_par = jnp.pad(xi_par, ((0, pad), (0, pad)))
        xi_trans = jnp.pad(xi_trans, ((0, pad), (0, pad)))

    kernel = _make_dpd_kernel(cell, gamma_parallel, gamma_transverse, boltzman,
                              T, dt, mass0, n, tile_m, tile_n)

    out = pl.pallas_call(
        kernel,
        out_shape=jax.ShapeDtypeStruct((n_pad, 3), jnp.float32),
        grid_spec=pltpu.PrefetchScalarGridSpec(
            num_scalar_prefetch=0,
            grid=(n_pad // tile_m, n_pad // tile_n),
            in_specs=[
                pl.BlockSpec((tile_m, 3), lambda i, j: (i, 0)),       # q row tile
                pl.BlockSpec((3, tile_n), lambda i, j: (0, j)),       # q.T col tile
                pl.BlockSpec((tile_m, 3), lambda i, j: (i, 0)),       # v row tile
                pl.BlockSpec((3, tile_n), lambda i, j: (0, j)),       # v.T col tile
                pl.BlockSpec((tile_m, tile_n), lambda i, j: (i, j)),  # xi_parallel
                pl.BlockSpec((tile_m, tile_n), lambda i, j: (i, j)),  # xi_transverse
            ],
            out_specs=pl.BlockSpec((tile_m, 3), lambda i, j: (i, 0)),
            scratch_shapes=[pltpu.VMEM((tile_m, tile_n), jnp.float32)] * 3,
        ),
        compiler_params=pltpu.CompilerParams(
            dimension_semantics=("parallel", "arbitrary")),
    )(q, q.T, v, v.T, xi_par, xi_trans)
    return out[:n]


def dpd_ref(q, v, xi_par, xi_trans, cell, T, dt, mass0,
            gamma_parallel, gamma_transverse, boltzman):
    """Pure-JAX reference mirroring the PyTorch DPD.forward with
    generate_nbr_list == all unique pairs (i < j) under the minimum image."""
    n = q.shape[0]
    cell = jnp.asarray(cell, jnp.float32)
    iu, ju = jnp.triu_indices(n, k=1)
    d = q[iu] - q[ju]
    d = d - cell * jnp.round(d / cell)
    r = jnp.linalg.norm(d, axis=1, keepdims=True)
    u = d / r
    v_ij = v[iu] - v[ju]
    v_par = jnp.sum(v_ij * u, axis=1, keepdims=True) * u
    v_trans = v_ij - v_par
    norms = jnp.linalg.norm(v_trans, axis=1, keepdims=True)
    v_t_unit = v_trans / norms
    friction = -v_par * gamma_parallel - v_trans * gamma_transverse
    c_par = jnp.sqrt(2.0 * gamma_parallel / mass0 * boltzman * T * dt)
    c_trans = (2.0 ** 0.5) * jnp.sqrt(
        2.0 * gamma_transverse / mass0 * boltzman * T * dt)
    rand = (xi_par[iu, ju][:, None] * (c_par / dt) * u
            + xi_trans[iu, ju][:, None] * (c_trans / dt) * v_t_unit)
    f = friction + rand
    dv = jnp.zeros_like(q)
    dv = dv.at[iu].add(f)
    dv = dv.at[ju].add(-f)
    return dv


if __name__ == "__main__":
    key = jax.random.PRNGKey(0)
    kq, kv, k1, k2 = jax.random.split(key, 4)

    # Module "parameters" / forward args (plain constants here).
    cell = (10.0, 10.0, 10.0)
    gamma_parallel = 0.1
    gamma_transverse = 0.1
    BOLTZMAN = 0.001987191
    T = 300.0
    dt = 0.005
    mass0 = 1.0

    n = 256  # atoms
    q = jax.random.uniform(kq, (n, 3), dtype=jnp.float32,
                           minval=0.0, maxval=cell[0])
    v = jax.random.normal(kv, (n, 3), dtype=jnp.float32)

    # One standard-normal draw per unique pair, stored symmetrically so the
    # ordered-pair formulation sees identical noise for (i, j) and (j, i).
    a1 = jnp.triu(jax.random.normal(k1, (n, n), dtype=jnp.float32), 1)
    a2 = jnp.triu(jax.random.normal(k2, (n, n), dtype=jnp.float32), 1)
    xi_par = a1 + a1.T
    xi_trans = a2 + a2.T

    out = jax.block_until_ready(
        dpd_pallas(q, v, xi_par, xi_trans, cell, T, dt, mass0,
                   gamma_parallel=gamma_parallel,
                   gamma_transverse=gamma_transverse,
                   boltzman=BOLTZMAN))
    ref = dpd_ref(q, v, xi_par, xi_trans, cell, T, dt, mass0,
                  gamma_parallel, gamma_transverse, BOLTZMAN)

    assert out.shape == (n, 3)
    rel_err = jnp.max(jnp.abs(out - ref)) / (jnp.max(jnp.abs(ref)) + 1e-12)
    assert bool(rel_err < 1e-3), float(rel_err)

    print("KERNEL_OK")
</pallas_src>

<mosaic_0001>
module attributes {stable_mosaic.version = 11 : i64} {
  func.func @kernel(%arg0: i32, %arg1: i32, %arg2: memref<128x3xf32, #tpu.memory_space<vmem>>, %arg3: memref<3x128xf32, #tpu.memory_space<vmem>>, %arg4: memref<128x3xf32, #tpu.memory_space<vmem>>, %arg5: memref<3x128xf32, #tpu.memory_space<vmem>>, %arg6: memref<128x128xf32, #tpu.memory_space<vmem>>, %arg7: memref<128x128xf32, #tpu.memory_space<vmem>>, %arg8: memref<128x3xf32, #tpu.memory_space<vmem>>, %arg9: memref<128x128xf32, #tpu.memory_space<vmem>>, %arg10: memref<128x128xf32, #tpu.memory_space<vmem>>, %arg11: memref<128x128xf32, #tpu.memory_space<vmem>>) attributes {dimension_semantics = [#tpu.dimension_semantics<parallel>, #tpu.dimension_semantics<arbitrary>], iteration_bounds = array<i64: 2, 2>, scalar_prefetch = 0 : i64, scratch_operands = 3 : i64, tpu.core_type = #tpu.core_type<tc>, window_params = [{transform_indices = @transform_0, window_bounds = array<i64: 128, 3>}, {transform_indices = @transform_1, window_bounds = array<i64: 3, 128>}, {transform_indices = @transform_2, window_bounds = array<i64: 128, 3>}, {transform_indices = @transform_3, window_bounds = array<i64: 3, 128>}, {transform_indices = @transform_4, window_bounds = array<i64: 128, 128>}, {transform_indices = @transform_5, window_bounds = array<i64: 128, 128>}, {transform_indices = @transform_6, window_bounds = array<i64: 128, 3>}]} {
    %c0_i32 = arith.constant 0 : i32
    %0 = arith.cmpi eq, %arg1, %c0_i32 : i32
    %1 = arith.extui %0 : i1 to i32
    %c0_i32_0 = arith.constant 0 : i32
    %2 = arith.cmpi ne, %1, %c0_i32_0 : i32
    scf.if %2 {
      %cst_40 = arith.constant 0.000000e+00 : f32
      %144 = vector.broadcast %cst_40 : f32 to vector<128x128xf32>
      %c0_41 = arith.constant 0 : index
      %c0_42 = arith.constant 0 : index
      %145 = vector.load %arg9[%c0_41, %c0_42] : memref<128x128xf32, #tpu.memory_space<vmem>>, vector<128x128xf32>
      tpu.vector_store %arg9[%c0_41, %c0_42], %144 {strides = array<i32>} : memref<128x128xf32, #tpu.memory_space<vmem>>, vector<128x128xf32>,
      %cst_43 = arith.constant 0.000000e+00 : f32
      %146 = vector.broadcast %cst_43 : f32 to vector<128x128xf32>
      %c0_44 = arith.constant 0 : index
      %c0_45 = arith.constant 0 : index
      %147 = vector.load %arg10[%c0_44, %c0_45] : memref<128x128xf32, #tpu.memory_space<vmem>>, vector<128x128xf32>
      tpu.vector_store %arg10[%c0_44, %c0_45], %146 {strides = array<i32>} : memref<128x128xf32, #tpu.memory_space<vmem>>, vector<128x128xf32>,
      %cst_46 = arith.constant 0.000000e+00 : f32
      %148 = vector.broadcast %cst_46 : f32 to vector<128x128xf32>
      %c0_47 = arith.constant 0 : index
      %c0_48 = arith.constant 0 : index
      %149 = vector.load %arg11[%c0_47, %c0_48] : memref<128x128xf32, #tpu.memory_space<vmem>>, vector<128x128xf32>
      tpu.vector_store %arg11[%c0_47, %c0_48], %148 {strides = array<i32>} : memref<128x128xf32, #tpu.memory_space<vmem>>, vector<128x128xf32>,
    } else {
    }
    %c0 = arith.constant 0 : index
    %c0_1 = arith.constant 0 : index
    %3 = vector.load %arg2[%c0, %c0_1] : memref<128x3xf32, #tpu.memory_space<vmem>>, vector<128x3xf32>
    %c0_2 = arith.constant 0 : index
    %c0_3 = arith.constant 0 : index
    %4 = vector.load %arg3[%c0_2, %c0_3] : memref<3x128xf32, #tpu.memory_space<vmem>>, vector<3x128xf32>
    %c0_4 = arith.constant 0 : index
    %c0_5 = arith.constant 0 : index
    %5 = vector.load %arg4[%c0_4, %c0_5] : memref<128x3xf32, #tpu.memory_space<vmem>>, vector<128x3xf32>
    %c0_6 = arith.constant 0 : index
    %c0_7 = arith.constant 0 : index
    %6 = vector.load %arg5[%c0_6, %c0_7] : memref<3x128xf32, #tpu.memory_space<vmem>>, vector<3x128xf32>
    %7 = vector.extract_strided_slice %3 {offsets = [0, 0], sizes = [128, 1], strides = [1, 1]} : vector<128x3xf32> to vector<128x1xf32>
    %8 = vector.extract_strided_slice %4 {offsets = [0, 0], sizes = [1, 128], strides = [1, 1]} : vector<3x128xf32> to vector<1x128xf32>
    %9 = vector.broadcast %7 : vector<128x1xf32> to vector<128x128xf32>
    %10 = vector.broadcast %8 : vector<1x128xf32> to vector<128x128xf32>
    %11 = arith.subf %9, %10 : vector<128x128xf32>
    %cst = arith.constant 1.000000e-01 : f32
    %12 = vector.broadcast %cst : f32 to vector<128x128xf32>
    %13 = arith.mulf %11, %12 : vector<128x128xf32>
    %14 = math.roundeven %13 : vector<128x128xf32>
    %cst_8 = arith.constant 1.000000e+01 : f32
    %15 = vector.broadcast %cst_8 : f32 to vector<128x128xf32>
    %16 = arith.mulf %15, %14 : vector<128x128xf32>
    %17 = arith.subf %11, %16 : vector<128x128xf32>
    %18 = vector.extract_strided_slice %3 {offsets = [0, 1], sizes = [128, 1], strides = [1, 1]} : vector<128x3xf32> to vector<128x1xf32>
    %19 = vector.extract_strided_slice %4 {offsets = [1, 0], sizes = [1, 128], strides = [1, 1]} : vector<3x128xf32> to vector<1x128xf32>
    %20 = vector.broadcast %18 : vector<128x1xf32> to vector<128x128xf32>
    %21 = vector.broadcast %19 : vector<1x128xf32> to vector<128x128xf32>
    %22 = arith.subf %20, %21 : vector<128x128xf32>
    %cst_9 = arith.constant 1.000000e-01 : f32
    %23 = vector.broadcast %cst_9 : f32 to vector<128x128xf32>
    %24 = arith.mulf %22, %23 : vector<128x128xf32>
    %25 = math.roundeven %24 : vector<128x128xf32>
    %cst_10 = arith.constant 1.000000e+01 : f32
    %26 = vector.broadcast %cst_10 : f32 to vector<128x128xf32>
    %27 = arith.mulf %26, %25 : vector<128x128xf32>
    %28 = arith.subf %22, %27 : vector<128x128xf32>
    %29 = vector.extract_strided_slice %3 {offsets = [0, 2], sizes = [128, 1], strides = [1, 1]} : vector<128x3xf32> to vector<128x1xf32>
    %30 = vector.extract_strided_slice %4 {offsets = [2, 0], sizes = [1, 128], strides = [1, 1]} : vector<3x128xf32> to vector<1x128xf32>
    %31 = vector.broadcast %29 : vector<128x1xf32> to vector<128x128xf32>
    %32 = vector.broadcast %30 : vector<1x128xf32> to vector<128x128xf32>
    %33 = arith.subf %31, %32 : vector<128x128xf32>
    %cst_11 = arith.constant 1.000000e-01 : f32
    %34 = vector.broadcast %cst_11 : f32 to vector<128x128xf32>
    %35 = arith.mulf %33, %34 : vector<128x128xf32>
    %36 = math.roundeven %35 : vector<128x128xf32>
    %cst_12 = arith.constant 1.000000e+01 : f32
    %37 = vector.broadcast %cst_12 : f32 to vector<128x128xf32>
    %38 = arith.mulf %37, %36 : vector<128x128xf32>
    %39 = arith.subf %33, %38 : vector<128x128xf32>
    %40 = arith.mulf %17, %17 : vector<128x128xf32>
    %41 = arith.mulf %28, %28 : vector<128x128xf32>
    %42 = arith.addf %40, %41 : vector<128x128xf32>
    %43 = arith.mulf %39, %39 : vector<128x128xf32>
    %44 = arith.addf %42, %43 : vector<128x128xf32>
    %c128_i32 = arith.constant 128 : i32
    %45 = arith.muli %arg0, %c128_i32 : i32
    %c128_i32_13 = arith.constant 128 : i32
    %46 = arith.muli %arg1, %c128_i32_13 : i32
    %47 = tpu.iota {dimensions = array<i32: 0>} : vector<128x128xi32>
    %48 = vector.broadcast %45 : i32 to vector<128x128xi32>
    %49 = arith.addi %48, %47 : vector<128x128xi32>
    %50 = tpu.iota {dimensions = array<i32: 1>} : vector<128x128xi32>
    %51 = vector.broadcast %46 : i32 to vector<128x128xi32>
    %52 = arith.addi %51, %50 : vector<128x128xi32>
    %53 = arith.cmpi ne, %49, %52 : vector<128x128xi32>
    %c256_i32 = arith.constant 256 : i32
    %54 = vector.broadcast %c256_i32 : i32 to vector<128x128xi32>
    %55 = arith.cmpi slt, %49, %54 : vector<128x128xi32>
    %56 = arith.andi %53, %55 : vector<128x128xi1>
    %c256_i32_14 = arith.constant 256 : i32
    %57 = vector.broadcast %c256_i32_14 : i32 to vector<128x128xi32>
    %58 = arith.cmpi slt, %52, %57 : vector<128x128xi32>
    %59 = arith.andi %56, %58 : vector<128x128xi1>
    %cst_15 = arith.constant 1.000000e+00 : f32
    %60 = vector.broadcast %cst_15 : f32 to vector<128x128xf32>
    %61 = arith.select %59, %44, %60 : vector<128x128xi1>, vector<128x128xf32>
    %62 = math.rsqrt %61 : vector<128x128xf32>
    %63 = arith.mulf %17, %62 : vector<128x128xf32>
    %64 = arith.mulf %28, %62 : vector<128x128xf32>
    %65 = arith.mulf %39, %62 : vector<128x128xf32>
    %66 = vector.extract_strided_slice %5 {offsets = [0, 0], sizes = [128, 1], strides = [1, 1]} : vector<128x3xf32> to vector<128x1xf32>
    %67 = vector.extract_strided_slice %6 {offsets = [0, 0], sizes = [1, 128], strides = [1, 1]} : vector<3x128xf32> to vector<1x128xf32>
    %68 = vector.broadcast %66 : vector<128x1xf32> to vector<128x128xf32>
    %69 = vector.broadcast %67 : vector<1x128xf32> to vector<128x128xf32>
    %70 = arith.subf %68, %69 : vector<128x128xf32>
    %71 = vector.extract_strided_slice %5 {offsets = [0, 1], sizes = [128, 1], strides = [1, 1]} : vector<128x3xf32> to vector<128x1xf32>
    %72 = vector.extract_strided_slice %6 {offsets = [1, 0], sizes = [1, 128], strides = [1, 1]} : vector<3x128xf32> to vector<1x128xf32>
    %73 = vector.broadcast %71 : vector<128x1xf32> to vector<128x128xf32>
    %74 = vector.broadcast %72 : vector<1x128xf32> to vector<128x128xf32>
    %75 = arith.subf %73, %74 : vector<128x128xf32>
    %76 = vector.extract_strided_slice %5 {offsets = [0, 2], sizes = [128, 1], strides = [1, 1]} : vector<128x3xf32> to vector<128x1xf32>
    %77 = vector.extract_strided_slice %6 {offsets = [2, 0], sizes = [1, 128], strides = [1, 1]} : vector<3x128xf32> to vector<1x128xf32>
    %78 = vector.broadcast %76 : vector<128x1xf32> to vector<128x128xf32>
    %79 = vector.broadcast %77 : vector<1x128xf32> to vector<128x128xf32>
    %80 = arith.subf %78, %79 : vector<128x128xf32>
    %81 = arith.mulf %70, %63 : vector<128x128xf32>
    %82 = arith.mulf %75, %64 : vector<128x128xf32>
    %83 = arith.addf %81, %82 : vector<128x128xf32>
    %84 = arith.mulf %80, %65 : vector<128x128xf32>
    %85 = arith.addf %83, %84 : vector<128x128xf32>
    %86 = arith.mulf %85, %63 : vector<128x128xf32>
    %87 = arith.mulf %85, %64 : vector<128x128xf32>
    %88 = arith.mulf %85, %65 : vector<128x128xf32>
    %89 = arith.subf %70, %86 : vector<128x128xf32>
    %90 = arith.subf %75, %87 : vector<128x128xf32>
    %91 = arith.subf %80, %88 : vector<128x128xf32>
    %92 = arith.mulf %89, %89 : vector<128x128xf32>
    %93 = arith.mulf %90, %90 : vector<128x128xf32>
    %94 = arith.addf %92, %93 : vector<128x128xf32>
    %95 = arith.mulf %91, %91 : vector<128x128xf32>
    %96 = arith.addf %94, %95 : vector<128x128xf32>
    %cst_16 = arith.constant 1.000000e+00 : f32
    %97 = vector.broadcast %cst_16 : f32 to vector<128x128xf32>
    %98 = arith.select %59, %96, %97 : vector<128x128xi1>, vector<128x128xf32>
    %99 = math.rsqrt %98 : vector<128x128xf32>
    %c0_17 = arith.constant 0 : index
    %c0_18 = arith.constant 0 : index
    %100 = vector.load %arg6[%c0_17, %c0_18] : memref<128x128xf32, #tpu.memory_space<vmem>>, vector<128x128xf32>
    %cst_19 = arith.constant 4.88326645 : f32
    %101 = vector.broadcast %cst_19 : f32 to vector<128x128xf32>
    %102 = arith.mulf %100, %101 : vector<128x128xf32>
    %c0_20 = arith.constant 0 : index
    %c0_21 = arith.constant 0 : index
    %103 = vector.load %arg7[%c0_20, %c0_21] : memref<128x128xf32, #tpu.memory_space<vmem>>, vector<128x128xf32>
    %cst_22 = arith.constant 6.90598154 : f32
    %104 = vector.broadcast %cst_22 : f32 to vector<128x128xf32>
    %105 = arith.mulf %103, %104 : vector<128x128xf32>
    %106 = arith.mulf %105, %99 : vector<128x128xf32>
    %cst_23 = arith.constant 1.000000e-01 : f32
    %107 = vector.broadcast %cst_23 : f32 to vector<128x128xf32>
    %108 = arith.subf %106, %107 : vector<128x128xf32>
    %109 = arith.extui %59 : vector<128x128xi1> to vector<128x128xi32>
    %110 = arith.sitofp %109 : vector<128x128xi32> to vector<128x128xf32>
    %111 = arith.mulf %102, %63 : vector<128x128xf32>
    %112 = arith.mulf %108, %89 : vector<128x128xf32>
    %113 = arith.addf %111, %112 : vector<128x128xf32>
    %cst_24 = arith.constant 1.000000e-01 : f32
    %114 = vector.broadcast %cst_24 : f32 to vector<128x128xf32>
    %115 = arith.mulf %114, %86 : vector<128x128xf32>
    %116 = arith.subf %113, %115 : vector<128x128xf32>
    %117 = arith.mulf %116, %110 : vector<128x128xf32>
    %118 = arith.mulf %102, %64 : vector<128x128xf32>
    %119 = arith.mulf %108, %90 : vector<128x128xf32>
    %120 = arith.addf %118, %119 : vector<128x128xf32>
    %cst_25 = arith.constant 1.000000e-01 : f32
    %121 = vector.broadcast %cst_25 : f32 to vector<128x128xf32>
    %122 = arith.mulf %121, %87 : vector<128x128xf32>
    %123 = arith.subf %120, %122 : vector<128x128xf32>
    %124 = arith.mulf %123, %110 : vector<128x128xf32>
    %125 = arith.mulf %102, %65 : vector<128x128xf32>
    %126 = arith.mulf %108, %91 : vector<128x128xf32>
    %127 = arith.addf %125, %126 : vector<128x128xf32>
    %cst_26 = arith.constant 1.000000e-01 : f32
    %128 = vector.broadcast %cst_26 : f32 to vector<128x128xf32>
    %129 = arith.mulf %128, %88 : vector<128x128xf32>
    %130 = arith.subf %127, %129 : vector<128x128xf32>
    %131 = arith.mulf %130, %110 : vector<128x128xf32>
    %c0_27 = arith.constant 0 : index
    %c0_28 = arith.constant 0 : index
    %132 = vector.load %arg9[%c0_27, %c0_28] : memref<128x128xf32, #tpu.memory_space<vmem>>, vector<128x128xf32>
    %133 = arith.addf %132, %117 : vector<128x128xf32>
    %c0_29 = arith.constant 0 : index
    %c0_30 = arith.constant 0 : index
    %134 = vector.load %arg9[%c0_29, %c0_30] : memref<128x128xf32, #tpu.memory_space<vmem>>, vector<128x128xf32>
    tpu.vector_store %arg9[%c0_29, %c0_30], %133 {strides = array<i32>} : memref<128x128xf32, #tpu.memory_space<vmem>>, vector<128x128xf32>,
    %c0_31 = arith.constant 0 : index
    %c0_32 = arith.constant 0 : index
    %135 = vector.load %arg10[%c0_31, %c0_32] : memref<128x128xf32, #tpu.memory_space<vmem>>, vector<128x128xf32>
    %136 = arith.addf %135, %124 : vector<128x128xf32>
    %c0_33 = arith.constant 0 : index
    %c0_34 = arith.constant 0 : index
    %137 = vector.load %arg10[%c0_33, %c0_34] : memref<128x128xf32, #tpu.memory_space<vmem>>, vector<128x128xf32>
    tpu.vector_store %arg10[%c0_33, %c0_34], %136 {strides = array<i32>} : memref<128x128xf32, #tpu.memory_space<vmem>>, vector<128x128xf32>,
    %c0_35 = arith.constant 0 : index
    %c0_36 = arith.constant 0 : index
    %138 = vector.load %arg11[%c0_35, %c0_36] : memref<128x128xf32, #tpu.memory_space<vmem>>, vector<128x128xf32>
    %139 = arith.addf %138, %131 : vector<128x128xf32>
    %c0_37 = arith.constant 0 : index
    %c0_38 = arith.constant 0 : index
    %140 = vector.load %arg11[%c0_37, %c0_38] : memref<128x128xf32, #tpu.memory_space<vmem>>, vector<128x128xf32>
    tpu.vector_store %arg11[%c0_37, %c0_38], %139 {strides = array<i32>} : memref<128x128xf32, #tpu.memory_space<vmem>>, vector<128x128xf32>,
    %c1_i32 = arith.constant 1 : i32
    %141 = arith.cmpi eq, %arg1, %c1_i32 : i32
    %142 = arith.extui %141 : i1 to i32
    %c0_i32_39 = arith.constant 0 : i32
    %143 = arith.cmpi ne, %142, %c0_i32_39 : i32
    scf.if %143 {
      %c0_40 = arith.constant 0 : index
      %c0_41 = arith.constant 0 : index
      %144 = vector.load %arg9[%c0_40, %c0_41] : memref<128x128xf32, #tpu.memory_space<vmem>>, vector<128x128xf32>
      %cst_42 = arith.constant dense<0.000000e+00> : vector<128xf32>
      %145 = vector.multi_reduction <add>, %144, %cst_42 [1] : vector<128x128xf32> to vector<128xf32>
      %146 = vector.shape_cast %145 : vector<128xf32> to vector<128x1xf32>
      %c0_43 = arith.constant 0 : index
      %c0_44 = arith.constant 0 : index
      %147 = vector.load %arg8[%c0_43, %c0_44] : memref<128x3xf32, #tpu.memory_space<vmem>>, vector<128x1xf32>
      tpu.vector_store %arg8[%c0_43, %c0_44], %146 {strides = array<i32>} : memref<128x3xf32, #tpu.memory_space<vmem>>, vector<128x1xf32>,
      %c0_45 = arith.constant 0 : index
      %c0_46 = arith.constant 0 : index
      %148 = vector.load %arg10[%c0_45, %c0_46] : memref<128x128xf32, #tpu.memory_space<vmem>>, vector<128x128xf32>
      %cst_47 = arith.constant dense<0.000000e+00> : vector<128xf32>
      %149 = vector.multi_reduction <add>, %148, %cst_47 [1] : vector<128x128xf32> to vector<128xf32>
      %150 = vector.shape_cast %149 : vector<128xf32> to vector<128x1xf32>
      %c0_48 = arith.constant 0 : index
      %c1 = arith.constant 1 : index
      %151 = vector.load %arg8[%c0_48, %c1] : memref<128x3xf32, #tpu.memory_space<vmem>>, vector<128x1xf32>
      tpu.vector_store %arg8[%c0_48, %c1], %150 {strides = array<i32>} : memref<128x3xf32, #tpu.memory_space<vmem>>, vector<128x1xf32>,
      %c0_49 = arith.constant 0 : index
      %c0_50 = arith.constant 0 : index
      %152 = vector.load %arg11[%c0_49, %c0_50] : memref<128x128xf32, #tpu.memory_space<vmem>>, vector<128x128xf32>
      %cst_51 = arith.constant dense<0.000000e+00> : vector<128xf32>
      %153 = vector.multi_reduction <add>, %152, %cst_51 [1] : vector<128x128xf32> to vector<128xf32>
      %154 = vector.shape_cast %153 : vector<128xf32> to vector<128x1xf32>
      %c0_52 = arith.constant 0 : index
      %c2 = arith.constant 2 : index
      %155 = vector.load %arg8[%c0_52, %c2] : memref<128x3xf32, #tpu.memory_space<vmem>>, vector<128x1xf32>
      tpu.vector_store %arg8[%c0_52, %c2], %154 {strides = array<i32>} : memref<128x3xf32, #tpu.memory_space<vmem>>, vector<128x1xf32>,
    } else {
    }
    return
  }
  func.func @transform_0(%arg0: i32, %arg1: i32) -> (i32, i32) {
    %c0_i32 = arith.constant 0 : i32
    %c0_i32_0 = arith.constant 0 : i32
    return %arg0, %c0_i32 : i32, i32
  }
  func.func @transform_1(%arg0: i32, %arg1: i32) -> (i32, i32) {
    %c0_i32 = arith.constant 0 : i32
    %c0_i32_0 = arith.constant 0 : i32
    return %c0_i32, %arg1 : i32, i32
  }
  func.func @transform_2(%arg0: i32, %arg1: i32) -> (i32, i32) {
    %c0_i32 = arith.constant 0 : i32
    %c0_i32_0 = arith.constant 0 : i32
    return %arg0, %c0_i32 : i32, i32
  }
  func.func @transform_3(%arg0: i32, %arg1: i32) -> (i32, i32) {
    %c0_i32 = arith.constant 0 : i32
    %c0_i32_0 = arith.constant 0 : i32
    return %c0_i32, %arg1 : i32, i32
  }
  func.func @transform_4(%arg0: i32, %arg1: i32) -> (i32, i32) {
    %c0_i32 = arith.constant 0 : i32
    return %arg0, %arg1 : i32, i32
  }
  func.func @transform_5(%arg0: i32, %arg1: i32) -> (i32, i32) {
    %c0_i32 = arith.constant 0 : i32
    return %arg0, %arg1 : i32, i32
  }
  func.func @transform_6(%arg0: i32, %arg1: i32) -> (i32, i32) {
    %c0_i32 = arith.constant 0 : i32
    %c0_i32_0 = arith.constant 0 : i32
    return %arg0, %c0_i32 : i32, i32
  }
}

</mosaic_0001>

<llo_original>
// kernel: tpu_custom_call.1
$region0: #{tpu_custom_call.1}
  #allocation0 [shape = 'u32[]', space=smem, size = 0x4, offset = 0x4, fixed_abs, tag = 'smem constant byte address 0x4 - core index']
  #allocation1 [shape = 'u32[144,128]{1,0:T(1,128)}', space=vmem, size = 0x12000, scoped, tag = 'internal scratch']
  #allocation2 [shape = 'f32[128,128]{1,0:T(8,128)}', space=vmem, size = 0x10000, scoped, tag = 'scratch operand']
  #allocation3 [shape = 'f32[128,128]{1,0:T(8,128)}', space=vmem, size = 0x10000, scoped, tag = 'scratch operand']
  #allocation4 [shape = 'f32[128,128]{1,0:T(8,128)}', space=vmem, size = 0x10000, scoped, tag = 'scratch operand']
  %s0 = inlined_call_operand.vmem [shape: f32[256,3], index: 0, kind: input, shape index: {}]
  %s1 = inlined_call_operand.vmem [shape: f32[3,256], index: 1, kind: input, shape index: {}]
  %s2 = inlined_call_operand.vmem [shape: f32[256,3], index: 2, kind: input, shape index: {}]
  %s3 = inlined_call_operand.vmem [shape: f32[3,256], index: 3, kind: input, shape index: {}]
  %s4 = inlined_call_operand.vmem [shape: f32[256,256], index: 4, kind: input, shape index: {}]
  %s5 = inlined_call_operand.hbm [shape: f32[256,256], index: 5, kind: input, shape index: {}]
  %s6 = inlined_call_operand.vmem [shape: f32[256,3], index: 6, kind: output, shape index: {}]
  %s7 = sld [smem:[#allocation0]]
  $region107: #{tpu_custom_call.1} parent=0
    _
  %s9 = ssub.s32 1, %s7
  %s10 = scalar_select 0, %s9, %s7
  $region1: #{tpu_custom_call.1} parent=0
    #allocation5 [shape = 'u8[131072]{0}', space=vmem, size = 0x20000, scoped, tag = 'input window, operand 4']
    #allocation6 [shape = 'u8[131072]{0}', space=vmem, size = 0x20000, scoped, tag = 'input window, operand 5']
    #allocation7 [shape = 's32[2]{0}', space=sflag, size = 0x8, scoped, tag = 'scoped memory for tpu_custom_call.1']
    %11 = vsyncpa [#allocation7], 0
    %s12 = scalar_lea.sflag [#allocation7], 1
    %13 = vsyncpa %s12, 0
    loop: start=0, step=1, limit=6
    $region2: #{tpu_custom_call.1} parent=1 // loop_pre_header
      _
    $region3: #{tpu_custom_call.1} parent=1 // loop_header
      %s15 = sphi 0, %s19
      %p16 = scmp.ge.s32.totalorder %s15, 6
      %s22 = sphi 0, %s34
      %s23 = sphi 0, %s30
      %s24 = sphi 0, %s22
      %s25 = sphi 0, %s23
      %s26 = sphi 0, %s24
      %s27 = sphi 0, %s25
      %s37 = sphi 0, %s39
      %s40 = sphi 0, %s37
      %s41 = sphi 0, %s40
      %s57 = sphi 0, %s41
      %s63 = sphi 0, %s65
      %s66 = sphi 0, %s63
      %s67 = sphi 0, %s66
      %s83 = sphi 0, %s67
      %s89 = sphi 0, %s91
      %s92 = sphi 0, %s89
      %s93 = sphi 0, %s92
      %s109 = sphi 0, %s93
      %s115 = sphi 0, %s117
      %s118 = sphi 0, %s115
      %s119 = sphi 0, %s118
      %s135 = sphi 0, %s119
      %s143 = sphi 0, %s145
      %s146 = sphi 0, %s143
      %s147 = sphi 0, %s146
      %s163 = sphi 0, %s147
      %s171 = sphi 0, %s173
      %s174 = sphi 0, %s171
      %s175 = sphi 0, %s174
      %s191 = sphi 0, %s175
      %s197 = sphi 0, %s199
      %s200 = sphi 0, %s197
      %s201 = sphi 0, %s200
      %s217 = sphi 0, %s201
    $region4: #{tpu_custom_call.1} parent=1 // loop_header_branch
      %18 = sbr.rel (%p16) target = $region8
    $region5: #{tpu_custom_call.1} parent=1 // loop_body
      %s20 = ssub.s32 %s15, 1
      %s21 = ssub.s32 %s15, 2
      %s28 = sadd.s32 1, %s23
      %p29 = scmp.ge.s32.totalorder %s28, 2
      %s30 = scalar_select %p29, 0, %s28
      %s31 = sadd.s32 1, %s22
      %s32 = scalar_select %p29, %s31, %s22
      %p33 = scmp.ge.s32.totalorder %s32, 2
      %s34 = scalar_select %p33, 0, %s32
      %s35 = ssub.s32 %s22, %s34
      %p36 = scmp.eq.s32.totalorder %s35, 0
      %s38 = sadd.s32 %s37, 1
      %s39 = scalar_select %p36, %s37, %s38
      %p42 = pneg %p36
      %p43 = scmp.eq.s32.totalorder %s15, 3
      %p44 = por %p42, %p43
      %p45 = scmp.ne.s32.totalorder %s37, %s40
      %p46 = scmp.eq.s32.totalorder %s15, 0
      %p47 = por %p45, %p46
      %p48 = scmp.ne.s32.totalorder %s37, %s40
      %p49 = scmp.eq.s32.totalorder %s20, 3
      %p50 = por %p48, %p49
      %p51 = scmp.ne.s32.totalorder %s40, %s41
      %p52 = scmp.eq.s32.totalorder %s20, 0
      %p53 = por %p51, %p52
      %p54 = scmp.ne.s32.totalorder %s40, %s41
      %p55 = scmp.eq.s32.totalorder %s21, 3
      %p56 = por %p54, %p55
      %p58 = scmp.ne.s32.totalorder %s41, %s57
      %p59 = scmp.eq.s32.totalorder %s21, 0
      %p60 = por %p58, %p59
      %s61 = ssub.s32 %s23, %s30
      %p62 = scmp.eq.s32.totalorder %s61, 0
      %s64 = sadd.s32 %s63, 1
      %s65 = scalar_select %p62, %s63, %s64
      %p68 = pneg %p62
      %p69 = scmp.eq.s32.totalorder %s15, 3
      %p70 = por %p68, %p69
      %p71 = scmp.ne.s32.totalorder %s63, %s66
      %p72 = scmp.eq.s32.totalorder %s15, 0
      %p73 = por %p71, %p72
      %p74 = scmp.ne.s32.totalorder %s63, %s66
      %p75 = scmp.eq.s32.totalorder %s20, 3
      %p76 = por %p74, %p75
      %p77 = scmp.ne.s32.totalorder %s66, %s67
      %p78 = scmp.eq.s32.totalorder %s20, 0
      %p79 = por %p77, %p78
      %p80 = scmp.ne.s32.totalorder %s66, %s67
      %p81 = scmp.eq.s32.totalorder %s21, 3
      %p82 = por %p80, %p81
      %p84 = scmp.ne.s32.totalorder %s67, %s83
      %p85 = scmp.eq.s32.totalorder %s21, 0
      %p86 = por %p84, %p85
      %s87 = ssub.s32 %s22, %s34
      %p88 = scmp.eq.s32.totalorder %s87, 0
      %s90 = sadd.s32 %s89, 1
      %s91 = scalar_select %p88, %s89, %s90
      %p94 = pneg %p88
      %p95 = scmp.eq.s32.totalorder %s15, 3
      %p96 = por %p94, %p95
      %p97 = scmp.ne.s32.totalorder %s89, %s92
      %p98 = scmp.eq.s32.totalorder %s15, 0
      %p99 = por %p97, %p98
      %p100 = scmp.ne.s32.totalorder %s89, %s92
      %p101 = scmp.eq.s32.totalorder %s20, 3
      %p102 = por %p100, %p101
      %p103 = scmp.ne.s32.totalorder %s92, %s93
      %p104 = scmp.eq.s32.totalorder %s20, 0
      %p105 = por %p103, %p104
      %p106 = scmp.ne.s32.totalorder %s92, %s93
      %p107 = scmp.eq.s32.totalorder %s21, 3
      %p108 = por %p106, %p107
      %p110 = scmp.ne.s32.totalorder %s93, %s109
      %p111 = scmp.eq.s32.totalorder %s21, 0
      %p112 = por %p110, %p111
      %s113 = ssub.s32 %s23, %s30
      %p114 = scmp.eq.s32.totalorder %s113, 0
      %s116 = sadd.s32 %s115, 1
      %s117 = scalar_select %p114, %s115, %s116
      %p120 = pneg %p114
      %p121 = scmp.eq.s32.totalorder %s15, 3
      %p122 = por %p120, %p121
      %p123 = scmp.ne.s32.totalorder %s115, %s118
      %p124 = scmp.eq.s32.totalorder %s15, 0
      %p125 = por %p123, %p124
      %p126 = scmp.ne.s32.totalorder %s115, %s118
      %p127 = scmp.eq.s32.totalorder %s20, 3
      %p128 = por %p126, %p127
      %p129 = scmp.ne.s32.totalorder %s118, %s119
      %p130 = scmp.eq.s32.totalorder %s20, 0
      %p131 = por %p129, %p130
      %p132 = scmp.ne.s32.totalorder %s118, %s119
      %p133 = scmp.eq.s32.totalorder %s21, 3
      %p134 = por %p132, %p133
      %p136 = scmp.ne.s32.totalorder %s119, %s135
      %p137 = scmp.eq.s32.totalorder %s21, 0
      %p138 = por %p136, %p137
      %s139 = ssub.s32 %s22, %s34
      %s140 = ssub.s32 %s23, %s30
      %s141 = sor.u32 %s139, %s140
      %p142 = scmp.eq.s32.totalorder %s141, 0
      %s144 = sadd.s32 %s143, 1
      %s145 = scalar_select %p142, %s143, %s144
      %p148 = pneg %p142
      %p149 = scmp.eq.s32.totalorder %s15, 3
      %p150 = por %p148, %p149
      %p151 = scmp.ne.s32.totalorder %s143, %s146
      %p152 = scmp.eq.s32.totalorder %s15, 0
      %p153 = por %p151, %p152
      %p154 = scmp.ne.s32.totalorder %s143, %s146
      %p155 = scmp.eq.s32.totalorder %s20, 3
      %p156 = por %p154, %p155
      %p157 = scmp.ne.s32.totalorder %s146, %s147
      %p158 = scmp.eq.s32.totalorder %s20, 0
      %p159 = por %p157, %p158
      %p160 = scmp.ne.s32.totalorder %s146, %s147
      %p161 = scmp.eq.s32.totalorder %s21, 3
      %p162 = por %p160, %p161
      %p164 = scmp.ne.s32.totalorder %s147, %s163
      %p165 = scmp.eq.s32.totalorder %s21, 0
      %p166 = por %p164, %p165
      %s167 = ssub.s32 %s22, %s34
      %s168 = ssub.s32 %s23, %s30
      %s169 = sor.u32 %s167, %s168
      %p170 = scmp.eq.s32.totalorder %s169, 0
      %s172 = sadd.s32 %s171, 1
      %s173 = scalar_select %p170, %s171, %s172
      %p176 = pneg %p170
      %p177 = scmp.eq.s32.totalorder %s15, 3
      %p178 = por %p176, %p177
      %p179 = scmp.ne.s32.totalorder %s171, %s174
      %p180 = scmp.eq.s32.totalorder %s15, 0
      %p181 = por %p179, %p180
      %p182 = scmp.ne.s32.totalorder %s171, %s174
      %p183 = scmp.eq.s32.totalorder %s20, 3
      %p184 = por %p182, %p183
      %p185 = scmp.ne.s32.totalorder %s174, %s175
      %p186 = scmp.eq.s32.totalorder %s20, 0
      %p187 = por %p185, %p186
      %p188 = scmp.ne.s32.totalorder %s174, %s175
      %p189 = scmp.eq.s32.totalorder %s21, 3
      %p190 = por %p188, %p189
      %p192 = scmp.ne.s32.totalorder %s175, %s191
      %p193 = scmp.eq.s32.totalorder %s21, 0
      %p194 = por %p192, %p193
      %s195 = ssub.s32 %s22, %s34
      %p196 = scmp.eq.s32.totalorder %s195, 0
      %s198 = sadd.s32 %s197, 1
      %s199 = scalar_select %p196, %s197, %s198
      %p202 = pneg %p196
      %p203 = scmp.eq.s32.totalorder %s15, 3
      %p204 = por %p202, %p203
      %p205 = scmp.ne.s32.totalorder %s197, %s200
      %p206 = scmp.eq.s32.totalorder %s15, 0
      %p207 = por %p205, %p206
      %p208 = scmp.ne.s32.totalorder %s197, %s200
      %p209 = scmp.eq.s32.totalorder %s20, 3
      %p210 = por %p208, %p209
      %p211 = scmp.ne.s32.totalorder %s200, %s201
      %p212 = scmp.eq.s32.totalorder %s20, 0
      %p213 = por %p211, %p212
      %p214 = scmp.ne.s32.totalorder %s200, %s201
      %p215 = scmp.eq.s32.totalorder %s21, 3
      %p216 = por %p214, %p215
      %p218 = scmp.ne.s32.totalorder %s201, %s217
      %p219 = scmp.eq.s32.totalorder %s21, 0
      %p220 = por %p218, %p219
      %p221 = scmp.le.s32.totalorder 1, %s15
      %p222 = scmp.lt.s32.totalorder %s15, 5
      %p223 = pnand %p221, %p222
      %p224 = pneg %p223
      // Predicated region
      $region9: #{tpu_custom_call.1} parent=5 // pred_check
        _
      $region10: #{tpu_custom_call.1} parent=5 // pred_check_branch
        %226 = sbr.rel (%p223) target = $region12
      $region11: #{tpu_custom_call.1} parent=5 // pred_region
        %s227 = ssub.s32 %s15, 1
      $region12: #{tpu_custom_call.1} parent=5 // pred_fallthru
        _
      %p228 = scmp.lt.s32.totalorder %s15, 4
      // Predicated region
      $region13: #{tpu_custom_call.1} parent=5 // pred_check
        %p229 = pneg %p228
      $region14: #{tpu_custom_call.1} parent=5 // pred_check_branch
        %231 = sbr.rel (%p229) target = $region16
      $region15: #{tpu_custom_call.1} parent=5 // pred_region
        // Predicated region
        $region17: #{tpu_custom_call.1} parent=15 // pred_check
          %p232 = pneg %p47
        $region18: #{tpu_custom_call.1} parent=15 // pred_check_branch
          %234 = sbr.rel (%p232) target = $region20
        $region19: #{tpu_custom_call.1} parent=15 // pred_region
          %s235 = smul.u32 16, %s22
          %p236 = scmp.lt.s32.totalorder %s235, 31
          %s237 = scalar_select %p236, %s235, 31
          %s238 = smul.addr %s237, 8
          %s239 = scalar_lea.vmem %s0, %s238
          %s240 = smul.u32 16, %s22
        $region20: #{tpu_custom_call.1} parent=15 // pred_fallthru
          _
        // Predicated region
        $region21: #{tpu_custom_call.1} parent=15 // pred_check
          %p241 = pneg %p73
        $region22: #{tpu_custom_call.1} parent=15 // pred_check_branch
          %243 = sbr.rel (%p241) target = $region24
        $region23: #{tpu_custom_call.1} parent=15 // pred_region
          %p244 = scmp.lt.s32.totalorder %s23, 1
          %s245 = scalar_select %p244, %s23, 1
          %s246 = smul.addr %s245, 4
          %s247 = scalar_lea.vmem %s1, %s246
        $region24: #{tpu_custom_call.1} parent=15 // pred_fallthru
          _
        // Predicated region
        $region25: #{tpu_custom_call.1} parent=15 // pred_check
          %p248 = pneg %p99
        $region26: #{tpu_custom_call.1} parent=15 // pred_check_branch
          %250 = sbr.rel (%p248) target = $region28
        $region27: #{tpu_custom_call.1} parent=15 // pred_region
          %s251 = smul.u32 16, %s22
          %p252 = scmp.lt.s32.totalorder %s251, 31
          %s253 = scalar_select %p252, %s251, 31
          %s254 = smul.addr %s253, 8
          %s255 = scalar_lea.vmem %s2, %s254
          %s256 = smul.u32 16, %s22
        $region28: #{tpu_custom_call.1} parent=15 // pred_fallthru
          _
        // Predicated region
        $region29: #{tpu_custom_call.1} parent=15 // pred_check
          %p257 = pneg %p125
        $region30: #{tpu_custom_call.1} parent=15 // pred_check_branch
          %259 = sbr.rel (%p257) target = $region32
        $region31: #{tpu_custom_call.1} parent=15 // pred_region
          %p260 = scmp.lt.s32.totalorder %s23, 1
          %s261 = scalar_select %p260, %s23, 1
          %s262 = smul.addr %s261, 4
          %s263 = scalar_lea.vmem %s3, %s262
        $region32: #{tpu_custom_call.1} parent=15 // pred_fallthru
          _
        // Predicated region
        $region33: #{tpu_custom_call.1} parent=15 // pred_check
          %p264 = pneg %p153
        $region34: #{tpu_custom_call.1} parent=15 // pred_check_branch
          %266 = sbr.rel (%p264) target = $region36
        $region35: #{tpu_custom_call.1} parent=15 // pred_region
          %s267 = sand.u32 %s143, 1
          %s268 = sand.u32 %s143, 1
          %s269 = smul.addr %s268, 128
          %s270 = scalar_lea.vmem [#allocation5], %s269
          %s271 = smul.u32 16, %s22
          %s272 = smul.addr %s271, 2
          %s273 = sadd.s32 %s23, %s272
          %s274 = smul.addr %s273, 8
          %s275 = scalar_lea.vmem %s4, %s274
          // Predicated region
          $region37: #{tpu_custom_call.1} parent=35 // pred_check
            _
          $region38: #{tpu_custom_call.1} parent=35 // pred_check_branch
            %277 = sbr.rel (0) target = $region40
          $region39: #{tpu_custom_call.1} parent=35 // pred_region
            // Predicated region
            $region41: #{tpu_custom_call.1} parent=39 // pred_check
              _
            $region42: #{tpu_custom_call.1} parent=39 // pred_check_branch
              %279 = sbr.rel (0) target = $region44
            $region43: #{tpu_custom_call.1} parent=39 // pred_region
              // Predicated region
              $region56: #{tpu_custom_call.1} parent=43 // pred_check
                _
              $region57: #{tpu_custom_call.1} parent=43 // pred_check_branch
                %324 = sbr.rel (0) target = $region59
              $region58: #{tpu_custom_call.1} parent=43 // pred_region
                loop: start=0, step=1, limit=1
                $region60: #{tpu_custom_call.1} parent=58 // loop_pre_header
                  _
                $region61: #{tpu_custom_call.1} parent=58 // loop_header
                  %s326 = sphi 0, %s330
                  %p327 = scmp.ge.s32.totalorder %s326, 1
                  %s331 = sphi %s275, %s275
                  %s332 = sphi %s270, %s270
                $region62: #{tpu_custom_call.1} parent=58 // loop_header_branch
                  %329 = sbr.rel (%p327) target = $region66
                $region63: #{tpu_custom_call.1} parent=58 // loop_body
                  %v333 = vld [vmem:[%s331] sm:$0xff]
                  %334 = vst [vmem:[%s332] sm:$0xff] %v333
                  %v335 = vld [vmem:[%s331 + $0x10] sm:$0xff]
                  %336 = vst [vmem:[%s332 + $0x8] sm:$0xff] %v335
                  %v337 = vld [vmem:[%s331 + $0x20] sm:$0xff]
                  %338 = vst [vmem:[%s332 + $0x10] sm:$0xff] %v337
                  %v339 = vld [vmem:[%s331 + $0x30] sm:$0xff]
                  %340 = vst [vmem:[%s332 + $0x18] sm:$0xff] %v339
                  %v341 = vld [vmem:[%s331 + $0x40] sm:$0xff]
                  %342 = vst [vmem:[%s332 + $0x20] sm:$0xff] %v341
                  %v343 = vld [vmem:[%s331 + $0x50] sm:$0xff]
                  %344 = vst [vmem:[%s332 + $0x28] sm:$0xff] %v343
                  %v345 = vld [vmem:[%s331 + $0x60] sm:$0xff]
                  %346 = vst [vmem:[%s332 + $0x30] sm:$0xff] %v345
                  %v347 = vld [vmem:[%s331 + $0x70] sm:$0xff]
                  %348 = vst [vmem:[%s332 + $0x38] sm:$0xff] %v347
                  %v349 = vld [vmem:[%s331 + $0x80] sm:$0xff]
                  %350 = vst [vmem:[%s332 + $0x40] sm:$0xff] %v349
                  %v351 = vld [vmem:[%s331 + $0x90] sm:$0xff]
                  %352 = vst [vmem:[%s332 + $0x48] sm:$0xff] %v351
                  %v353 = vld [vmem:[%s331 + $0xa0] sm:$0xff]
                  %354 = vst [vmem:[%s332 + $0x50] sm:$0xff] %v353
                  %v355 = vld [vmem:[%s331 + $0xb0] sm:$0xff]
                  %356 = vst [vmem:[%s332 + $0x58] sm:$0xff] %v355
                  %v357 = vld [vmem:[%s331 + $0xc0] sm:$0xff]
                  %358 = vst [vmem:[%s332 + $0x60] sm:$0xff] %v357
                  %v359 = vld [vmem:[%s331 + $0xd0] sm:$0xff]
                  %360 = vst [vmem:[%s332 + $0x68] sm:$0xff] %v359
                  %v361 = vld [vmem:[%s331 + $0xe0] sm:$0xff]
                  %362 = vst [vmem:[%s332 + $0x70] sm:$0xff] %v361
                  %v363 = vld [vmem:[%s331 + $0xf0] sm:$0xff]
                  %364 = vst [vmem:[%s332 + $0x78] sm:$0xff] %v363
                $region64: #{tpu_custom_call.1} parent=58 // loop_footer
                  %s330 = sadd.s32 1, %s326
                $region65: #{tpu_custom_call.1} parent=58 // loop_footer_branch
                  %325 = sbr.rel target = $region61
                $region66: #{tpu_custom_call.1} parent=58 // loop_exit
                  _
              $region59: #{tpu_custom_call.1} parent=43 // pred_fallthru
                _
              // Predicated region
              $region67: #{tpu_custom_call.1} parent=43 // pred_check
                _
              $region68: #{tpu_custom_call.1} parent=43 // pred_check_branch
                %366 = sbr.rel target = $region70
              $region69: #{tpu_custom_call.1} parent=43 // pred_region
                _
              $region70: #{tpu_custom_call.1} parent=43 // pred_fallthru
                _
            $region44: #{tpu_custom_call.1} parent=39 // pred_fallthru
              _
            // Predicated region
            $region45: #{tpu_custom_call.1} parent=39 // pred_check
              _
            $region46: #{tpu_custom_call.1} parent=39 // pred_check_branch
              %281 = sbr.rel target = $region48
            $region47: #{tpu_custom_call.1} parent=39 // pred_region
              loop: start=0, step=1, limit=1
              $region49: #{tpu_custom_call.1} parent=47 // loop_pre_header
                _
              $region50: #{tpu_custom_call.1} parent=47 // loop_header
                %s284 = sphi 0, %s288
                %p285 = scmp.ge.s32.totalorder %s284, 1
                %s289 = sphi %s275, %s275
                %s290 = sphi %s270, %s270
              $region51: #{tpu_custom_call.1} parent=47 // loop_header_branch
                %287 = sbr.rel (%p285) target = $region55
              $region52: #{tpu_custom_call.1} parent=47 // loop_body
                %v291 = vld [vmem:[%s289] sm:$0xff]
                %292 = vst [vmem:[%s290] sm:$0xff] %v291
                %v293 = vld [vmem:[%s289 + $0x10] sm:$0xff]
                %294 = vst [vmem:[%s290 + $0x8] sm:$0xff] %v293
                %v295 = vld [vmem:[%s289 + $0x20] sm:$0xff]
                %296 = vst [vmem:[%s290 + $0x10] sm:$0xff] %v295
                %v297 = vld [vmem:[%s289 + $0x30] sm:$0xff]
                %298 = vst [vmem:[%s290 + $0x18] sm:$0xff] %v297
                %v299 = vld [vmem:[%s289 + $0x40] sm:$0xff]
                %300 = vst [vmem:[%s290 + $0x20] sm:$0xff] %v299
                %v301 = vld [vmem:[%s289 + $0x50] sm:$0xff]
                %302 = vst [vmem:[%s290 + $0x28] sm:$0xff] %v301
                %v303 = vld [vmem:[%s289 + $0x60] sm:$0xff]
                %304 = vst [vmem:[%s290 + $0x30] sm:$0xff] %v303
                %v305 = vld [vmem:[%s289 + $0x70] sm:$0xff]
                %306 = vst [vmem:[%s290 + $0x38] sm:$0xff] %v305
                %v307 = vld [vmem:[%s289 + $0x80] sm:$0xff]
                %308 = vst [vmem:[%s290 + $0x40] sm:$0xff] %v307
                %v309 = vld [vmem:[%s289 + $0x90] sm:$0xff]
                %310 = vst [vmem:[%s290 + $0x48] sm:$0xff] %v309
                %v311 = vld [vmem:[%s289 + $0xa0] sm:$0xff]
                %312 = vst [vmem:[%s290 + $0x50] sm:$0xff] %v311
                %v313 = vld [vmem:[%s289 + $0xb0] sm:$0xff]
                %314 = vst [vmem:[%s290 + $0x58] sm:$0xff] %v313
                %v315 = vld [vmem:[%s289 + $0xc0] sm:$0xff]
                %316 = vst [vmem:[%s290 + $0x60] sm:$0xff] %v315
                %v317 = vld [vmem:[%s289 + $0xd0] sm:$0xff]
                %318 = vst [vmem:[%s290 + $0x68] sm:$0xff] %v317
                %v319 = vld [vmem:[%s289 + $0xe0] sm:$0xff]
                %320 = vst [vmem:[%s290 + $0x70] sm:$0xff] %v319
                %v321 = vld [vmem:[%s289 + $0xf0] sm:$0xff]
                %322 = vst [vmem:[%s290 + $0x78] sm:$0xff] %v321
              $region53: #{tpu_custom_call.1} parent=47 // loop_footer
                %s288 = sadd.s32 1, %s284
              $region54: #{tpu_custom_call.1} parent=47 // loop_footer_branch
                %283 = sbr.rel target = $region50
              $region55: #{tpu_custom_call.1} parent=47 // loop_exit
                _
            $region48: #{tpu_custom_call.1} parent=39 // pred_fallthru
              _
          $region40: #{tpu_custom_call.1} parent=35 // pred_fallthru
            _
          %367 = vnop
        $region36: #{tpu_custom_call.1} parent=15 // pred_fallthru
          _
        // Predicated region
        $region71: #{tpu_custom_call.1} parent=15 // pred_check
          %p368 = pneg %p181
        $region72: #{tpu_custom_call.1} parent=15 // pred_check_branch
          %370 = sbr.rel (%p368) target = $region74
        $region73: #{tpu_custom_call.1} parent=15 // pred_region
          %s371 = sand.u32 %s171, 1
          %s372 = scalar_lea.sflag [#allocation7], %s371
          %s373 = sand.u32 %s171, 1
          %s374 = smul.addr %s373, 128
          %s375 = scalar_lea.vmem [#allocation6], %s374
          %s376 = smul.u32 16, %s22
          %s378 = ssub.s32 2048, 2048
          %379 = vsyncadd %s372, %s378
          %s380 = smul.addr %s376, 2
          %s381 = sadd.s32 %s23, %s380
          %s382 = smul.addr %s381, 128
          %s383 = scalar_lea.hbm %s5, %s382
          %s384 = sshll.u32 %s375, 4
          %s385 = int_to_ptr.vmem [resolvable:$true] %s384
          %390 = dma.hbm_to_vmem [thread:$0]  %s383, 2048, %s385, %s372, 256, 128, 8
        $region74: #{tpu_custom_call.1} parent=15 // pred_fallthru
          _
      $region16: #{tpu_custom_call.1} parent=5 // pred_fallthru
        _
      %p391 = scmp.le.s32.totalorder 1, %s15
      %p392 = scmp.lt.s32.totalorder %s15, 5
      %p393 = pnand %p391, %p392
      %p394 = pneg %p393
      // Predicated region
      $region75: #{tpu_custom_call.1} parent=5 // pred_check
        _
      $region76: #{tpu_custom_call.1} parent=5 // pred_check_branch
        %396 = sbr.rel (%p393) target = $region78
      $region77: #{tpu_custom_call.1} parent=5 // pred_region
        %s397 = ssub.s32 %s15, 1
        %s398 = sand.u32 %s146, 1
        %s399 = sand.u32 %s146, 1
        %s400 = smul.addr %s399, 128
        %s401 = scalar_lea.vmem [#allocation5], %s400
        // Predicated region
        $region79: #{tpu_custom_call.1} parent=77 // pred_check
          %p402 = pneg %p159
        $region80: #{tpu_custom_call.1} parent=77 // pred_check_branch
          %404 = sbr.rel (%p402) target = $region82
        $region81: #{tpu_custom_call.1} parent=77 // pred_region
          _
        $region82: #{tpu_custom_call.1} parent=77 // pred_fallthru
          _
        %s405 = sand.u32 %s174, 1
        %s406 = scalar_lea.sflag [#allocation7], %s405
        %s407 = sand.u32 %s174, 1
        %s408 = smul.addr %s407, 128
        %s409 = scalar_lea.vmem [#allocation6], %s408
        // Predicated region
        $region83: #{tpu_custom_call.1} parent=77 // pred_check
          %p410 = pneg %p187
        $region84: #{tpu_custom_call.1} parent=77 // pred_check_branch
          %412 = sbr.rel (%p410) target = $region86
        $region85: #{tpu_custom_call.1} parent=77 // pred_region
          %413 = dma.done %s406, 2048
        $region86: #{tpu_custom_call.1} parent=77 // pred_fallthru
          _
        %s414 = smul.u32 16, %s24
        %p415 = scmp.lt.s32.totalorder %s414, 31
        %s416 = scalar_select %p415, %s414, 31
        %s417 = smul.addr %s416, 8
        %s418 = scalar_lea.vmem %s0, %s417
        %p419 = pneg %p53
        %p420 = pneg %p50
        %p421 = scmp.lt.s32.totalorder %s25, 1
        %s422 = scalar_select %p421, %s25, 1
        %s423 = smul.addr %s422, 4
        %s424 = scalar_lea.vmem %s1, %s423
        %p425 = pneg %p79
        %p426 = pneg %p76
        %s427 = smul.u32 16, %s24
        %p428 = scmp.lt.s32.totalorder %s427, 31
        %s429 = scalar_select %p428, %s427, 31
        %s430 = smul.addr %s429, 8
        %s431 = scalar_lea.vmem %s2, %s430
        %p432 = pneg %p105
        %p433 = pneg %p102
        %p434 = scmp.lt.s32.totalorder %s25, 1
        %s435 = scalar_select %p434, %s25, 1
        %s436 = smul.addr %s435, 4
        %s437 = scalar_lea.vmem %s3, %s436
        %p438 = pneg %p131
        %p439 = pneg %p128
        %s440 = sand.u32 %s146, 1
        %s441 = sand.u32 %s146, 1
        %s442 = smul.addr %s441, 128
        %s443 = scalar_lea.vmem [#allocation5], %s442
        %p444 = pneg %p159
        %p445 = pneg %p156
        %s446 = sand.u32 %s174, 1
        %s447 = scalar_lea.sflag [#allocation7], %s446
        %s448 = sand.u32 %s174, 1
        %s449 = smul.addr %s448, 128
        %s450 = scalar_lea.vmem [#allocation6], %s449
        %p451 = pneg %p187
        %p452 = pneg %p184
        %p453 = pneg %p213
        %p454 = pneg %p210
        %s455 = smul.u32 16, %s24
        %p456 = scmp.lt.s32.totalorder %s455, 31
        %s457 = scalar_select %p456, %s455, 31
        %s458 = smul.addr %s457, 8
        %s459 = scalar_lea.vmem %s6, %s458
        %s460 = smul.u32 16, %s24
        %p461 = scmp.lt.s32.totalorder %s460, 31
        %s462 = scalar_select %p461, %s460, 31
        %s463 = smul.addr %s462, 8
        %s464 = scalar_lea.vmem %s0, %s463
        %s465 = smul.u32 16, %s24
        %p466 = scmp.lt.s32.totalorder %s25, 1
        %s467 = scalar_select %p466, %s25, 1
        %s468 = smul.addr %s467, 4
        %s469 = scalar_lea.vmem %s1, %s468
        %s470 = smul.u32 16, %s24
        %p471 = scmp.lt.s32.totalorder %s470, 31
        %s472 = scalar_select %p471, %s470, 31
        %s473 = smul.addr %s472, 8
        %s474 = scalar_lea.vmem %s2, %s473
        %s475 = smul.u32 16, %s24
        %p476 = scmp.lt.s32.totalorder %s25, 1
        %s477 = scalar_select %p476, %s25, 1
        %s478 = smul.addr %s477, 4
        %s479 = scalar_lea.vmem %s3, %s478
        %s480 = smul.u32 16, %s24
        %s481 = smul.u32 16, %s24
        %s482 = smul.u32 16, %s24
        %p483 = scmp.lt.s32.totalorder %s482, 31
        %s484 = scalar_select %p483, %s482, 31
        %s485 = smul.addr %s484, 8
        %s486 = scalar_lea.vmem %s6, %s485
        %s487 = smul.u32 16, %s24
        %p488 = scmp.eq.s32.totalorder %s25, 0
        // Predicated region
        $region87: #{tpu_custom_call.1} parent=77 // pred_check
          %p489 = pneg %p488
        $region88: #{tpu_custom_call.1} parent=77 // pred_check_branch
          %491 = sbr.rel (%p489) target = $region90
        $region89: #{tpu_custom_call.1} parent=77 // pred_region
          %492 = vst [vmem:[#allocation2] sm:$0xff] 0.0
          %493 = vst [vmem:[#allocation2 + $0x8] sm:$0xff] 0.0
          %494 = vst [vmem:[#allocation2 + $0x10] sm:$0xff] 0.0
          %495 = vst [vmem:[#allocation2 + $0x18] sm:$0xff] 0.0
          %496 = vst [vmem:[#allocation2 + $0x20] sm:$0xff] 0.0
          %497 = vst [vmem:[#allocation2 + $0x28] sm:$0xff] 0.0
          %498 = vst [vmem:[#allocation2 + $0x30] sm:$0xff] 0.0
          %499 = vst [vmem:[#allocation2 + $0x38] sm:$0xff] 0.0
          %500 = vst [vmem:[#allocation2 + $0x40] sm:$0xff] 0.0
          %501 = vst [vmem:[#allocation2 + $0x48] sm:$0xff] 0.0
          %502 = vst [vmem:[#allocation2 + $0x50] sm:$0xff] 0.0
          %503 = vst [vmem:[#allocation2 + $0x58] sm:$0xff] 0.0
          %504 = vst [vmem:[#allocation2 + $0x60] sm:$0xff] 0.0
          %505 = vst [vmem:[#allocation2 + $0x68] sm:$0xff] 0.0
          %506 = vst [vmem:[#allocation2 + $0x70] sm:$0xff] 0.0
          %507 = vst [vmem:[#allocation2 + $0x78] sm:$0xff] 0.0
          %508 = vst [vmem:[#allocation3] sm:$0xff] 0.0
          %509 = vst [vmem:[#allocation3 + $0x8] sm:$0xff] 0.0
          %510 = vst [vmem:[#allocation3 + $0x10] sm:$0xff] 0.0
          %511 = vst [vmem:[#allocation3 + $0x18] sm:$0xff] 0.0
          %512 = vst [vmem:[#allocation3 + $0x20] sm:$0xff] 0.0
          %513 = vst [vmem:[#allocation3 + $0x28] sm:$0xff] 0.0
          %514 = vst [vmem:[#allocation3 + $0x30] sm:$0xff] 0.0
          %515 = vst [vmem:[#allocation3 + $0x38] sm:$0xff] 0.0
          %516 = vst [vmem:[#allocation3 + $0x40] sm:$0xff] 0.0
          %517 = vst [vmem:[#allocation3 + $0x48] sm:$0xff] 0.0
          %518 = vst [vmem:[#allocation3 + $0x50] sm:$0xff] 0.0
          %519 = vst [vmem:[#allocation3 + $0x58] sm:$0xff] 0.0
          %520 = vst [vmem:[#allocation3 + $0x60] sm:$0xff] 0.0
          %521 = vst [vmem:[#allocation3 + $0x68] sm:$0xff] 0.0
          %522 = vst [vmem:[#allocation3 + $0x70] sm:$0xff] 0.0
          %523 = vst [vmem:[#allocation3 + $0x78] sm:$0xff] 0.0
          %524 = vst [vmem:[#allocation4] sm:$0xff] 0.0
          %525 = vst [vmem:[#allocation4 + $0x8] sm:$0xff] 0.0
          %526 = vst [vmem:[#allocation4 + $0x10] sm:$0xff] 0.0
          %527 = vst [vmem:[#allocation4 + $0x18] sm:$0xff] 0.0
          %528 = vst [vmem:[#allocation4 + $0x20] sm:$0xff] 0.0
          %529 = vst [vmem:[#allocation4 + $0x28] sm:$0xff] 0.0
          %530 = vst [vmem:[#allocation4 + $0x30] sm:$0xff] 0.0
          %531 = vst [vmem:[#allocation4 + $0x38] sm:$0xff] 0.0
          %532 = vst [vmem:[#allocation4 + $0x40] sm:$0xff] 0.0
          %533 = vst [vmem:[#allocation4 + $0x48] sm:$0xff] 0.0
          %534 = vst [vmem:[#allocation4 + $0x50] sm:$0xff] 0.0
          %535 = vst [vmem:[#allocation4 + $0x58] sm:$0xff] 0.0
          %536 = vst [vmem:[#allocation4 + $0x60] sm:$0xff] 0.0
          %537 = vst [vmem:[#allocation4 + $0x68] sm:$0xff] 0.0
          %538 = vst [vmem:[#allocation4 + $0x70] sm:$0xff] 0.0
          %539 = vst [vmem:[#allocation4 + $0x78] sm:$0xff] 0.0
        $region90: #{tpu_custom_call.1} parent=77 // pred_fallthru
          _
        %v540 = vld [vmem:[%s464] sm:$0xff]
        %v541 = vld [vmem:[%s464 + $0x8] sm:$0xff]
        %v542 = vld [vmem:[%s464 + $0x10] sm:$0xff]
        %v543 = vld [vmem:[%s464 + $0x18] sm:$0xff]
        %v544 = vld [vmem:[%s464 + $0x20] sm:$0xff]
        %v545 = vld [vmem:[%s464 + $0x28] sm:$0xff]
        %v546 = vld [vmem:[%s464 + $0x30] sm:$0xff]
        %v547 = vld [vmem:[%s464 + $0x38] sm:$0xff]
        %v548 = vld [vmem:[%s464 + $0x40] sm:$0xff]
        %v549 = vld [vmem:[%s464 + $0x48] sm:$0xff]
        %v550 = vld [vmem:[%s464 + $0x50] sm:$0xff]
        %v551 = vld [vmem:[%s464 + $0x58] sm:$0xff]
        %v552 = vld [vmem:[%s464 + $0x60] sm:$0xff]
        %v553 = vld [vmem:[%s464 + $0x68] sm:$0xff]
        %v554 = vld [vmem:[%s464 + $0x70] sm:$0xff]
        %v555 = vld [vmem:[%s464 + $0x78] sm:$0xff]
        %v556 = vld [vmem:[%s469] sm:$0x7]
        %v557 = vld [vmem:[%s474] sm:$0xff]
        %v558 = vld [vmem:[%s474 + $0x8] sm:$0xff]
        %v559 = vld [vmem:[%s474 + $0x10] sm:$0xff]
        %v560 = vld [vmem:[%s474 + $0x18] sm:$0xff]
        %v561 = vld [vmem:[%s474 + $0x20] sm:$0xff]
        %v562 = vld [vmem:[%s474 + $0x28] sm:$0xff]
        %v563 = vld [vmem:[%s474 + $0x30] sm:$0xff]
        %v564 = vld [vmem:[%s474 + $0x38] sm:$0xff]
        %v565 = vld [vmem:[%s474 + $0x40] sm:$0xff]
        %v566 = vld [vmem:[%s474 + $0x48] sm:$0xff]
        %v567 = vld [vmem:[%s474 + $0x50] sm:$0xff]
        %v568 = vld [vmem:[%s474 + $0x58] sm:$0xff]
        %v569 = vld [vmem:[%s474 + $0x60] sm:$0xff]
        %v570 = vld [vmem:[%s474 + $0x68] sm:$0xff]
        %v571 = vld [vmem:[%s474 + $0x70] sm:$0xff]
        %v572 = vld [vmem:[%s474 + $0x78] sm:$0xff]
        %v573 = vld [vmem:[%s479] sm:$0x7]
        %575 = vset.pattern.permute.xlu0 0
        %576 = vperm.xlu0 %575, %v540
        %v577 = vpop.permute.xlu0 %576
        %580 = vset.pattern.permute.xlu0 0
        %581 = vperm.xlu0 %580, %v541
        %v582 = vpop.permute.xlu0 %581
        %585 = vset.pattern.permute.xlu0 0
        %586 = vperm.xlu0 %585, %v542
        %v587 = vpop.permute.xlu0 %586
        %590 = vset.pattern.permute.xlu0 0
        %591 = vperm.xlu0 %590, %v543
        %v592 = vpop.permute.xlu0 %591
        %595 = vset.pattern.permute.xlu0 0
        %596 = vperm.xlu0 %595, %v544
        %v597 = vpop.permute.xlu0 %596
        %600 = vset.pattern.permute.xlu0 0
        %601 = vperm.xlu0 %600, %v545
        %v602 = vpop.permute.xlu0 %601
        %605 = vset.pattern.permute.xlu0 0
        %606 = vperm.xlu0 %605, %v546
        %v607 = vpop.permute.xlu0 %606
        %610 = vset.pattern.permute.xlu0 0
        %611 = vperm.xlu0 %610, %v547
        %v612 = vpop.permute.xlu0 %611
        %615 = vset.pattern.permute.xlu0 0
        %616 = vperm.xlu0 %615, %v548
        %v617 = vpop.permute.xlu0 %616
        %620 = vset.pattern.permute.xlu0 0
        %621 = vperm.xlu0 %620, %v549
        %v622 = vpop.permute.xlu0 %621
        %625 = vset.pattern.permute.xlu0 0
        %626 = vperm.xlu0 %625, %v550
        %v627 = vpop.permute.xlu0 %626
        %630 = vset.pattern.permute.xlu0 0
        %631 = vperm.xlu0 %630, %v551
        %v632 = vpop.permute.xlu0 %631
        %635 = vset.pattern.permute.xlu0 0
        %636 = vperm.xlu0 %635, %v552
        %v637 = vpop.permute.xlu0 %636
        %640 = vset.pattern.permute.xlu0 0
        %641 = vperm.xlu0 %640, %v553
        %v642 = vpop.permute.xlu0 %641
        %645 = vset.pattern.permute.xlu0 0
        %646 = vperm.xlu0 %645, %v554
        %v647 = vpop.permute.xlu0 %646
        %650 = vset.pattern.permute.xlu0 0
        %651 = vperm.xlu0 %650, %v555
        %v652 = vpop.permute.xlu0 %651
        %v654 = vlaneseq
        %v655 = vshrl.u32 %v654, 7
        %v656 = vsub.s32 0, %v655
        %v657 = vrot.slane %v556, %v656
        %v658 = vsub.f32 %v577, %v657
        %v659 = vsub.f32 %v582, %v657
        %v660 = vsub.f32 %v587, %v657
        %v661 = vsub.f32 %v592, %v657
        %v662 = vsub.f32 %v597, %v657
        %v663 = vsub.f32 %v602, %v657
        %v664 = vsub.f32 %v607, %v657
        %v665 = vsub.f32 %v612, %v657
        %v666 = vsub.f32 %v617, %v657
        %v667 = vsub.f32 %v622, %v657
        %v668 = vsub.f32 %v627, %v657
        %v669 = vsub.f32 %v632, %v657
        %v670 = vsub.f32 %v637, %v657
        %v671 = vsub.f32 %v642, %v657
        %v672 = vsub.f32 %v647, %v657
        %v673 = vsub.f32 %v652, %v657
        %v674 = vmul.f32 %v658, 0.1
        %v675 = vmul.f32 %v659, 0.1
        %v676 = vmul.f32 %v660, 0.1
        %v677 = vmul.f32 %v661, 0.1
        %v678 = vmul.f32 %v662, 0.1
        %v679 = vmul.f32 %v663, 0.1
        %v680 = vmul.f32 %v664, 0.1
        %v681 = vmul.f32 %v665, 0.1
        %v682 = vmul.f32 %v666, 0.1
        %v683 = vmul.f32 %v667, 0.1
        %v684 = vmul.f32 %v668, 0.1
        %v685 = vmul.f32 %v669, 0.1
        %v686 = vmul.f32 %v670, 0.1
        %v687 = vmul.f32 %v671, 0.1
        %v688 = vmul.f32 %v672, 0.1
        %v689 = vmul.f32 %v673, 0.1
        %v690 = vround.ne.pseudo %v674
        %v691 = vround.ne.pseudo %v675
        %v692 = vround.ne.pseudo %v676
        %v693 = vround.ne.pseudo %v677
        %v694 = vround.ne.pseudo %v678
        %v695 = vround.ne.pseudo %v679
        %v696 = vround.ne.pseudo %v680
        %v697 = vround.ne.pseudo %v681
        %v698 = vround.ne.pseudo %v682
        %v699 = vround.ne.pseudo %v683
        %v700 = vround.ne.pseudo %v684
        %v701 = vround.ne.pseudo %v685
        %v702 = vround.ne.pseudo %v686
        %v703 = vround.ne.pseudo %v687
        %v704 = vround.ne.pseudo %v688
        %v705 = vround.ne.pseudo %v689
        %v706 = vmul.f32 %v690, 10.0
        %v707 = vmul.f32 %v691, 10.0
        %v708 = vmul.f32 %v692, 10.0
        %v709 = vmul.f32 %v693, 10.0
        %v710 = vmul.f32 %v694, 10.0
        %v711 = vmul.f32 %v695, 10.0
        %v712 = vmul.f32 %v696, 10.0
        %v713 = vmul.f32 %v697, 10.0
        %v714 = vmul.f32 %v698, 10.0
        %v715 = vmul.f32 %v699, 10.0
        %v716 = vmul.f32 %v700, 10.0
        %v717 = vmul.f32 %v701, 10.0
        %v718 = vmul.f32 %v702, 10.0
        %v719 = vmul.f32 %v703, 10.0
        %v720 = vmul.f32 %v704, 10.0
        %v721 = vmul.f32 %v705, 10.0
        %v722 = vsub.f32 %v658, %v706
        %v723 = vsub.f32 %v659, %v707
        %v724 = vsub.f32 %v660, %v708
        %v725 = vsub.f32 %v661, %v709
        %v726 = vsub.f32 %v662, %v710
        %v727 = vsub.f32 %v663, %v711
        %v728 = vsub.f32 %v664, %v712
        %v729 = vsub.f32 %v665, %v713
        %v730 = vsub.f32 %v666, %v714
        %v731 = vsub.f32 %v667, %v715
        %v732 = vsub.f32 %v668, %v716
        %v733 = vsub.f32 %v669, %v717
        %v734 = vsub.f32 %v670, %v718
        %v735 = vsub.f32 %v671, %v719
        %v736 = vsub.f32 %v672, %v720
        %v737 = vsub.f32 %v673, %v721
        %738 = vset.pattern.permute.xlu0 1
        %739 = vperm.xlu0 %738, %v540
        %v740 = vpop.permute.xlu0 %739
        %742 = vset.pattern.permute.xlu0 1
        %743 = vperm.xlu0 %742, %v541
        %v744 = vpop.permute.xlu0 %743
        %746 = vset.pattern.permute.xlu0 1
        %747 = vperm.xlu0 %746, %v542
        %v748 = vpop.permute.xlu0 %747
        %750 = vset.pattern.permute.xlu0 1
        %751 = vperm.xlu0 %750, %v543
        %v752 = vpop.permute.xlu0 %751
        %754 = vset.pattern.permute.xlu0 1
        %755 = vperm.xlu0 %754, %v544
        %v756 = vpop.permute.xlu0 %755
        %758 = vset.pattern.permute.xlu0 1
        %759 = vperm.xlu0 %758, %v545
        %v760 = vpop.permute.xlu0 %759
        %762 = vset.pattern.permute.xlu0 1
        %763 = vperm.xlu0 %762, %v546
        %v764 = vpop.permute.xlu0 %763
        %766 = vset.pattern.permute.xlu0 1
        %767 = vperm.xlu0 %766, %v547
        %v768 = vpop.permute.xlu0 %767
        %770 = vset.pattern.permute.xlu0 1
        %771 = vperm.xlu0 %770, %v548
        %v772 = vpop.permute.xlu0 %771
        %774 = vset.pattern.permute.xlu0 1
        %775 = vperm.xlu0 %774, %v549
        %v776 = vpop.permute.xlu0 %775
        %778 = vset.pattern.permute.xlu0 1
        %779 = vperm.xlu0 %778, %v550
        %v780 = vpop.permute.xlu0 %779
        %782 = vset.pattern.permute.xlu0 1
        %783 = vperm.xlu0 %782, %v551
        %v784 = vpop.permute.xlu0 %783
        %786 = vset.pattern.permute.xlu0 1
        %787 = vperm.xlu0 %786, %v552
        %v788 = vpop.permute.xlu0 %787
        %790 = vset.pattern.permute.xlu0 1
        %791 = vperm.xlu0 %790, %v553
        %v792 = vpop.permute.xlu0 %791
        %794 = vset.pattern.permute.xlu0 1
        %795 = vperm.xlu0 %794, %v554
        %v796 = vpop.permute.xlu0 %795
        %798 = vset.pattern.permute.xlu0 1
        %799 = vperm.xlu0 %798, %v555
        %v800 = vpop.permute.xlu0 %799
        %v802 = vlaneseq
        %v803 = vshrl.u32 %v802, 7
        %v804 = vsub.s32 1, %v803
        %v805 = vrot.slane %v556, %v804
        %v806 = vsub.f32 %v740, %v805
        %v807 = vsub.f32 %v744, %v805
        %v808 = vsub.f32 %v748, %v805
        %v809 = vsub.f32 %v752, %v805
        %v810 = vsub.f32 %v756, %v805
        %v811 = vsub.f32 %v760, %v805
        %v812 = vsub.f32 %v764, %v805
        %v813 = vsub.f32 %v768, %v805
        %v814 = vsub.f32 %v772, %v805
        %v815 = vsub.f32 %v776, %v805
        %v816 = vsub.f32 %v780, %v805
        %v817 = vsub.f32 %v784, %v805
        %v818 = vsub.f32 %v788, %v805
        %v819 = vsub.f32 %v792, %v805
        %v820 = vsub.f32 %v796, %v805
        %v821 = vsub.f32 %v800, %v805
        %v822 = vmul.f32 %v806, 0.1
        %v823 = vmul.f32 %v807, 0.1
        %v824 = vmul.f32 %v808, 0.1
        %v825 = vmul.f32 %v809, 0.1
        %v826 = vmul.f32 %v810, 0.1
        %v827 = vmul.f32 %v811, 0.1
        %v828 = vmul.f32 %v812, 0.1
        %v829 = vmul.f32 %v813, 0.1
        %v830 = vmul.f32 %v814, 0.1
        %v831 = vmul.f32 %v815, 0.1
        %v832 = vmul.f32 %v816, 0.1
        %v833 = vmul.f32 %v817, 0.1
        %v834 = vmul.f32 %v818, 0.1
        %v835 = vmul.f32 %v819, 0.1
        %v836 = vmul.f32 %v820, 0.1
        %v837 = vmul.f32 %v821, 0.1
        %v838 = vround.ne.pseudo %v822
        %v839 = vround.ne.pseudo %v823
        %v840 = vround.ne.pseudo %v824
        %v841 = vround.ne.pseudo %v825
        %v842 = vround.ne.pseudo %v826
        %v843 = vround.ne.pseudo %v827
        %v844 = vround.ne.pseudo %v828
        %v845 = vround.ne.pseudo %v829
        %v846 = vround.ne.pseudo %v830
        %v847 = vround.ne.pseudo %v831
        %v848 = vround.ne.pseudo %v832
        %v849 = vround.ne.pseudo %v833
        %v850 = vround.ne.pseudo %v834
        %v851 = vround.ne.pseudo %v835
        %v852 = vround.ne.pseudo %v836
        %v853 = vround.ne.pseudo %v837
        %v854 = vmul.f32 %v838, 10.0
        %v855 = vmul.f32 %v839, 10.0
        %v856 = vmul.f32 %v840, 10.0
        %v857 = vmul.f32 %v841, 10.0
        %v858 = vmul.f32 %v842, 10.0
        %v859 = vmul.f32 %v843, 10.0
        %v860 = vmul.f32 %v844, 10.0
        %v861 = vmul.f32 %v845, 10.0
        %v862 = vmul.f32 %v846, 10.0
        %v863 = vmul.f32 %v847, 10.0
        %v864 = vmul.f32 %v848, 10.0
        %v865 = vmul.f32 %v849, 10.0
        %v866 = vmul.f32 %v850, 10.0
        %v867 = vmul.f32 %v851, 10.0
        %v868 = vmul.f32 %v852, 10.0
        %v869 = vmul.f32 %v853, 10.0
        %v870 = vsub.f32 %v806, %v854
        %v871 = vsub.f32 %v807, %v855
        %v872 = vsub.f32 %v808, %v856
        %v873 = vsub.f32 %v809, %v857
        %v874 = vsub.f32 %v810, %v858
        %v875 = vsub.f32 %v811, %v859
        %v876 = vsub.f32 %v812, %v860
        %v877 = vsub.f32 %v813, %v861
        %v878 = vsub.f32 %v814, %v862
        %v879 = vsub.f32 %v815, %v863
        %v880 = vsub.f32 %v816, %v864
        %v881 = vsub.f32 %v817, %v865
        %v882 = vsub.f32 %v818, %v866
        %v883 = vsub.f32 %v819, %v867
        %v884 = vsub.f32 %v820, %v868
        %v885 = vsub.f32 %v821, %v869
        %886 = vset.pattern.permute.xlu0 2
        %887 = vperm.xlu0 %886, %v540
        %v888 = vpop.permute.xlu0 %887
        %890 = vset.pattern.permute.xlu0 2
        %891 = vperm.xlu0 %890, %v541
        %v892 = vpop.permute.xlu0 %891
        %894 = vset.pattern.permute.xlu0 2
        %895 = vperm.xlu0 %894, %v542
        %v896 = vpop.permute.xlu0 %895
        %898 = vset.pattern.permute.xlu0 2
        %899 = vperm.xlu0 %898, %v543
        %v900 = vpop.permute.xlu0 %899
        %902 = vset.pattern.permute.xlu0 2
        %903 = vperm.xlu0 %902, %v544
        %v904 = vpop.permute.xlu0 %903
        %906 = vset.pattern.permute.xlu0 2
        %907 = vperm.xlu0 %906, %v545
        %v908 = vpop.permute.xlu0 %907
        %910 = vset.pattern.permute.xlu0 2
        %911 = vperm.xlu0 %910, %v546
        %v912 = vpop.permute.xlu0 %911
        %914 = vset.pattern.permute.xlu0 2
        %915 = vperm.xlu0 %914, %v547
        %v916 = vpop.permute.xlu0 %915
        %918 = vset.pattern.permute.xlu0 2
        %919 = vperm.xlu0 %918, %v548
        %v920 = vpop.permute.xlu0 %919
        %922 = vset.pattern.permute.xlu0 2
        %923 = vperm.xlu0 %922, %v549
        %v924 = vpop.permute.xlu0 %923
        %926 = vset.pattern.permute.xlu0 2
        %927 = vperm.xlu0 %926, %v550
        %v928 = vpop.permute.xlu0 %927
        %930 = vset.pattern.permute.xlu0 2
        %931 = vperm.xlu0 %930, %v551
        %v932 = vpop.permute.xlu0 %931
        %934 = vset.pattern.permute.xlu0 2
        %935 = vperm.xlu0 %934, %v552
        %v936 = vpop.permute.xlu0 %935
        %938 = vset.pattern.permute.xlu0 2
        %939 = vperm.xlu0 %938, %v553
        %v940 = vpop.permute.xlu0 %939
        %942 = vset.pattern.permute.xlu0 2
        %943 = vperm.xlu0 %942, %v554
        %v944 = vpop.permute.xlu0 %943
        %946 = vset.pattern.permute.xlu0 2
        %947 = vperm.xlu0 %946, %v555
        %v948 = vpop.permute.xlu0 %947
        %v950 = vlaneseq
        %v951 = vshrl.u32 %v950, 7
        %v952 = vsub.s32 2, %v951
        %v953 = vrot.slane %v556, %v952
        %v954 = vsub.f32 %v888, %v953
        %v955 = vsub.f32 %v892, %v953
        %v956 = vsub.f32 %v896, %v953
        %v957 = vsub.f32 %v900, %v953
        %v958 = vsub.f32 %v904, %v953
        %v959 = vsub.f32 %v908, %v953
        %v960 = vsub.f32 %v912, %v953
        %v961 = vsub.f32 %v916, %v953
        %v962 = vsub.f32 %v920, %v953
        %v963 = vsub.f32 %v924, %v953
        %v964 = vsub.f32 %v928, %v953
        %v965 = vsub.f32 %v932, %v953
        %v966 = vsub.f32 %v936, %v953
        %v967 = vsub.f32 %v940, %v953
        %v968 = vsub.f32 %v944, %v953
        %v969 = vsub.f32 %v948, %v953
        %v970 = vmul.f32 %v954, 0.1
        %v971 = vmul.f32 %v955, 0.1
        %v972 = vmul.f32 %v956, 0.1
        %v973 = vmul.f32 %v957, 0.1
        %v974 = vmul.f32 %v958, 0.1
        %v975 = vmul.f32 %v959, 0.1
        %v976 = vmul.f32 %v960, 0.1
        %v977 = vmul.f32 %v961, 0.1
        %v978 = vmul.f32 %v962, 0.1
        %v979 = vmul.f32 %v963, 0.1
        %v980 = vmul.f32 %v964, 0.1
        %v981 = vmul.f32 %v965, 0.1
        %v982 = vmul.f32 %v966, 0.1
        %v983 = vmul.f32 %v967, 0.1
        %v984 = vmul.f32 %v968, 0.1
        %v985 = vmul.f32 %v969, 0.1
        %v986 = vround.ne.pseudo %v970
        %v987 = vround.ne.pseudo %v971
        %v988 = vround.ne.pseudo %v972
        %v989 = vround.ne.pseudo %v973
        %v990 = vround.ne.pseudo %v974
        %v991 = vround.ne.pseudo %v975
        %v992 = vround.ne.pseudo %v976
        %v993 = vround.ne.pseudo %v977
        %v994 = vround.ne.pseudo %v978
        %v995 = vround.ne.pseudo %v979
        %v996 = vround.ne.pseudo %v980
        %v997 = vround.ne.pseudo %v981
        %v998 = vround.ne.pseudo %v982
        %v999 = vround.ne.pseudo %v983
        %v1000 = vround.ne.pseudo %v984
        %v1001 = vround.ne.pseudo %v985
        %v1002 = vmul.f32 %v986, 10.0
        %v1003 = vmul.f32 %v987, 10.0
        %v1004 = vmul.f32 %v988, 10.0
        %v1005 = vmul.f32 %v989, 10.0
        %v1006 = vmul.f32 %v990, 10.0
        %v1007 = vmul.f32 %v991, 10.0
        %v1008 = vmul.f32 %v992, 10.0
        %v1009 = vmul.f32 %v993, 10.0
        %v1010 = vmul.f32 %v994, 10.0
        %v1011 = vmul.f32 %v995, 10.0
        %v1012 = vmul.f32 %v996, 10.0
        %v1013 = vmul.f32 %v997, 10.0
        %v1014 = vmul.f32 %v998, 10.0
        %v1015 = vmul.f32 %v999, 10.0
        %v1016 = vmul.f32 %v1000, 10.0
        %v1017 = vmul.f32 %v1001, 10.0
        %v1018 = vsub.f32 %v954, %v1002
        %v1019 = vsub.f32 %v955, %v1003
        %v1020 = vsub.f32 %v956, %v1004
        %v1021 = vsub.f32 %v957, %v1005
        %v1022 = vsub.f32 %v958, %v1006
        %v1023 = vsub.f32 %v959, %v1007
        %v1024 = vsub.f32 %v960, %v1008
        %v1025 = vsub.f32 %v961, %v1009
        %v1026 = vsub.f32 %v962, %v1010
        %v1027 = vsub.f32 %v963, %v1011
        %v1028 = vsub.f32 %v964, %v1012
        %v1029 = vsub.f32 %v965, %v1013
        %v1030 = vsub.f32 %v966, %v1014
        %v1031 = vsub.f32 %v967, %v1015
        %v1032 = vsub.f32 %v968, %v1016
        %v1033 = vsub.f32 %v969, %v1017
        %v1034 = vmul.f32 %v722, %v722
        %v1035 = vmul.f32 %v723, %v723
        %v1036 = vmul.f32 %v724, %v724
        %v1037 = vmul.f32 %v725, %v725
        %v1038 = vmul.f32 %v726, %v726
        %v1039 = vmul.f32 %v727, %v727
        %v1040 = vmul.f32 %v728, %v728
        %v1041 = vmul.f32 %v729, %v729
        %v1042 = vmul.f32 %v730, %v730
        %v1043 = vmul.f32 %v731, %v731
        %v1044 = vmul.f32 %v732, %v732
        %v1045 = vmul.f32 %v733, %v733
        %v1046 = vmul.f32 %v734, %v734
        %v1047 = vmul.f32 %v735, %v735
        %v1048 = vmul.f32 %v736, %v736
        %v1049 = vmul.f32 %v737, %v737
        %v1050 = vmul.f32 %v870, %v870
        %v1051 = vmul.f32 %v871, %v871
        %v1052 = vmul.f32 %v872, %v872
        %v1053 = vmul.f32 %v873, %v873
        %v1054 = vmul.f32 %v874, %v874
        %v1055 = vmul.f32 %v875, %v875
        %v1056 = vmul.f32 %v876, %v876
        %v1057 = vmul.f32 %v877, %v877
        %v1058 = vmul.f32 %v878, %v878
        %v1059 = vmul.f32 %v879, %v879
        %v1060 = vmul.f32 %v880, %v880
        %v1061 = vmul.f32 %v881, %v881
        %v1062 = vmul.f32 %v882, %v882
        %v1063 = vmul.f32 %v883, %v883
        %v1064 = vmul.f32 %v884, %v884
        %v1065 = vmul.f32 %v885, %v885
        %v1066 = vadd.f32 %v1034, %v1050
        %v1067 = vadd.f32 %v1035, %v1051
        %v1068 = vadd.f32 %v1036, %v1052
        %v1069 = vadd.f32 %v1037, %v1053
        %v1070 = vadd.f32 %v1038, %v1054
        %v1071 = vadd.f32 %v1039, %v1055
        %v1072 = vadd.f32 %v1040, %v1056
        %v1073 = vadd.f32 %v1041, %v1057
        %v1074 = vadd.f32 %v1042, %v1058
        %v1075 = vadd.f32 %v1043, %v1059
        %v1076 = vadd.f32 %v1044, %v1060
        %v1077 = vadd.f32 %v1045, %v1061
        %v1078 = vadd.f32 %v1046, %v1062
        %v1079 = vadd.f32 %v1047, %v1063
        %v1080 = vadd.f32 %v1048, %v1064
        %v1081 = vadd.f32 %v1049, %v1065
        %v1082 = vmul.f32 %v1018, %v1018
        %v1083 = vmul.f32 %v1019, %v1019
        %v1084 = vmul.f32 %v1020, %v1020
        %v1085 = vmul.f32 %v1021, %v1021
        %v1086 = vmul.f32 %v1022, %v1022
        %v1087 = vmul.f32 %v1023, %v1023
        %v1088 = vmul.f32 %v1024, %v1024
        %v1089 = vmul.f32 %v1025, %v1025
        %v1090 = vmul.f32 %v1026, %v1026
        %v1091 = vmul.f32 %v1027, %v1027
        %v1092 = vmul.f32 %v1028, %v1028
        %v1093 = vmul.f32 %v1029, %v1029
        %v1094 = vmul.f32 %v1030, %v1030
        %v1095 = vmul.f32 %v1031, %v1031
        %v1096 = vmul.f32 %v1032, %v1032
        %v1097 = vmul.f32 %v1033, %v1033
        %v1098 = vadd.f32 %v1066, %v1082
        %v1099 = vadd.f32 %v1067, %v1083
        %v1100 = vadd.f32 %v1068, %v1084
        %v1101 = vadd.f32 %v1069, %v1085
        %v1102 = vadd.f32 %v1070, %v1086
        %v1103 = vadd.f32 %v1071, %v1087
        %v1104 = vadd.f32 %v1072, %v1088
        %v1105 = vadd.f32 %v1073, %v1089
        %v1106 = vadd.f32 %v1074, %v1090
        %v1107 = vadd.f32 %v1075, %v1091
        %v1108 = vadd.f32 %v1076, %v1092
        %v1109 = vadd.f32 %v1077, %v1093
        %v1110 = vadd.f32 %v1078, %v1094
        %v1111 = vadd.f32 %v1079, %v1095
        %v1112 = vadd.f32 %v1080, %v1096
        %v1113 = vadd.f32 %v1081, %v1097
        %s1114 = smul.u32 %s24, 128
        %s1115 = smul.u32 %s25, 128
        %v1116 = vlaneseq
        %v1117 = vshrl.u32 %v1116, 7
        %v1118 = vadd.s32 %v1117, 8
        %v1119 = vadd.s32 %v1117, 16
        %v1120 = vadd.s32 %v1117, 24
        %v1121 = vadd.s32 %v1117, 32
        %v1122 = vadd.s32 %v1117, 40
        %v1123 = vadd.s32 %v1117, 48
        %v1124 = vadd.s32 %v1117, 56
        %v1125 = vadd.s32 %v1117, 64
        %v1126 = vadd.s32 %v1117, 72
        %v1127 = vadd.s32 %v1117, 80
        %v1128 = vadd.s32 %v1117, 88
        %v1129 = vadd.s32 %v1117, 96
        %v1130 = vadd.s32 %v1117, 104
        %v1131 = vadd.s32 %v1117, 112
        %v1132 = vadd.s32 %v1117, 120
        %v1133 = vstv %s1114
        %v1134 = vadd.s32 %v1133, %v1117
        %v1135 = vadd.s32 %v1133, %v1118
        %v1136 = vadd.s32 %v1133, %v1119
        %v1137 = vadd.s32 %v1133, %v1120
        %v1138 = vadd.s32 %v1133, %v1121
        %v1139 = vadd.s32 %v1133, %v1122
        %v1140 = vadd.s32 %v1133, %v1123
        %v1141 = vadd.s32 %v1133, %v1124
        %v1142 = vadd.s32 %v1133, %v1125
        %v1143 = vadd.s32 %v1133, %v1126
        %v1144 = vadd.s32 %v1133, %v1127
        %v1145 = vadd.s32 %v1133, %v1128
        %v1146 = vadd.s32 %v1133, %v1129
        %v1147 = vadd.s32 %v1133, %v1130
        %v1148 = vadd.s32 %v1133, %v1131
        %v1149 = vadd.s32 %v1133, %v1132
        %v1150 = vlaneseq
        %v1151 = vand.u32 %v1150, 127
        %v1152 = vstv %s1115
        %v1153 = vadd.s32 %v1152, %v1151
        %vm1154 = vcmp.ne.s32.totalorder %v1134, %v1153
        %vm1155 = vcmp.ne.s32.totalorder %v1135, %v1153
        %vm1156 = vcmp.ne.s32.totalorder %v1136, %v1153
        %vm1157 = vcmp.ne.s32.totalorder %v1137, %v1153
        %vm1158 = vcmp.ne.s32.totalorder %v1138, %v1153
        %vm1159 = vcmp.ne.s32.totalorder %v1139, %v1153
        %vm1160 = vcmp.ne.s32.totalorder %v1140, %v1153
        %vm1161 = vcmp.ne.s32.totalorder %v1141, %v1153
        %vm1162 = vcmp.ne.s32.totalorder %v1142, %v1153
        %vm1163 = vcmp.ne.s32.totalorder %v1143, %v1153
        %vm1164 = vcmp.ne.s32.totalorder %v1144, %v1153
        %vm1165 = vcmp.ne.s32.totalorder %v1145, %v1153
        %vm1166 = vcmp.ne.s32.totalorder %v1146, %v1153
        %vm1167 = vcmp.ne.s32.totalorder %v1147, %v1153
        %vm1168 = vcmp.ne.s32.totalorder %v1148, %v1153
        %vm1169 = vcmp.ne.s32.totalorder %v1149, %v1153
        %vm1170 = vcmp.lt.s32.totalorder %v1134, 256
        %vm1171 = vcmp.lt.s32.totalorder %v1135, 256
        %vm1172 = vcmp.lt.s32.totalorder %v1136, 256
        %vm1173 = vcmp.lt.s32.totalorder %v1137, 256
        %vm1174 = vcmp.lt.s32.totalorder %v1138, 256
        %vm1175 = vcmp.lt.s32.totalorder %v1139, 256
        %vm1176 = vcmp.lt.s32.totalorder %v1140, 256
        %vm1177 = vcmp.lt.s32.totalorder %v1141, 256
        %vm1178 = vcmp.lt.s32.totalorder %v1142, 256
        %vm1179 = vcmp.lt.s32.totalorder %v1143, 256
        %vm1180 = vcmp.lt.s32.totalorder %v1144, 256
        %vm1181 = vcmp.lt.s32.totalorder %v1145, 256
        %vm1182 = vcmp.lt.s32.totalorder %v1146, 256
        %vm1183 = vcmp.lt.s32.totalorder %v1147, 256
        %vm1184 = vcmp.lt.s32.totalorder %v1148, 256
        %vm1185 = vcmp.lt.s32.totalorder %v1149, 256
        %vm1186 = vmand %vm1154, %vm1170
        %vm1187 = vmand %vm1155, %vm1171
        %vm1188 = vmand %vm1156, %vm1172
        %vm1189 = vmand %vm1157, %vm1173
        %vm1190 = vmand %vm1158, %vm1174
        %vm1191 = vmand %vm1159, %vm1175
        %vm1192 = vmand %vm1160, %vm1176
        %vm1193 = vmand %vm1161, %vm1177
        %vm1194 = vmand %vm1162, %vm1178
        %vm1195 = vmand %vm1163, %vm1179
        %vm1196 = vmand %vm1164, %vm1180
        %vm1197 = vmand %vm1165, %vm1181
        %vm1198 = vmand %vm1166, %vm1182
        %vm1199 = vmand %vm1167, %vm1183
        %vm1200 = vmand %vm1168, %vm1184
        %vm1201 = vmand %vm1169, %vm1185
        %vm1202 = vcmp.lt.s32.totalorder %v1153, 256
        %vm1203 = vmand %vm1186, %vm1202
        %vm1204 = vmand %vm1187, %vm1202
        %vm1205 = vmand %vm1188, %vm1202
        %vm1206 = vmand %vm1189, %vm1202
        %vm1207 = vmand %vm1190, %vm1202
        %vm1208 = vmand %vm1191, %vm1202
        %vm1209 = vmand %vm1192, %vm1202
        %vm1210 = vmand %vm1193, %vm1202
        %vm1211 = vmand %vm1194, %vm1202
        %vm1212 = vmand %vm1195, %vm1202
        %vm1213 = vmand %vm1196, %vm1202
        %vm1214 = vmand %vm1197, %vm1202
        %vm1215 = vmand %vm1198, %vm1202
        %vm1216 = vmand %vm1199, %vm1202
        %vm1217 = vmand %vm1200, %vm1202
        %vm1218 = vmand %vm1201, %vm1202
        %v1219 = vsel %vm1203, %v1098, 1.0
        %v1220 = vsel %vm1204, %v1099, 1.0
        %v1221 = vsel %vm1205, %v1100, 1.0
        %v1222 = vsel %vm1206, %v1101, 1.0
        %v1223 = vsel %vm1207, %v1102, 1.0
        %v1224 = vsel %vm1208, %v1103, 1.0
        %v1225 = vsel %vm1209, %v1104, 1.0
        %v1226 = vsel %vm1210, %v1105, 1.0
        %v1227 = vsel %vm1211, %v1106, 1.0
        %v1228 = vsel %vm1212, %v1107, 1.0
        %v1229 = vsel %vm1213, %v1108, 1.0
        %v1230 = vsel %vm1214, %v1109, 1.0
        %v1231 = vsel %vm1215, %v1110, 1.0
        %v1232 = vsel %vm1216, %v1111, 1.0
        %v1233 = vsel %vm1217, %v1112, 1.0
        %v1234 = vsel %vm1218, %v1113, 1.0
        %v1235 = vrsqrt.pop %v1219
        %v1236 = vrsqrt.pop %v1220
        %v1237 = vrsqrt.pop %v1221
        %v1238 = vrsqrt.pop %v1222
        %v1239 = vrsqrt.pop %v1223
        %v1240 = vrsqrt.pop %v1224
        %v1241 = vrsqrt.pop %v1225
        %v1242 = vrsqrt.pop %v1226
        %v1243 = vrsqrt.pop %v1227
        %v1244 = vrsqrt.pop %v1228
        %v1245 = vrsqrt.pop %v1229
        %v1246 = vrsqrt.pop %v1230
        %v1247 = vrsqrt.pop %v1231
        %v1248 = vrsqrt.pop %v1232
        %v1249 = vrsqrt.pop %v1233
        %v1250 = vrsqrt.pop %v1234
        %v1251 = vmul.f32 %v722, %v1235
        %v1252 = vmul.f32 %v723, %v1236
        %v1253 = vmul.f32 %v724, %v1237
        %v1254 = vmul.f32 %v725, %v1238
        %v1255 = vmul.f32 %v726, %v1239
        %v1256 = vmul.f32 %v727, %v1240
        %v1257 = vmul.f32 %v728, %v1241
        %v1258 = vmul.f32 %v729, %v1242
        %v1259 = vmul.f32 %v730, %v1243
        %v1260 = vmul.f32 %v731, %v1244
        %v1261 = vmul.f32 %v732, %v1245
        %v1262 = vmul.f32 %v733, %v1246
        %v1263 = vmul.f32 %v734, %v1247
        %v1264 = vmul.f32 %v735, %v1248
        %v1265 = vmul.f32 %v736, %v1249
        %v1266 = vmul.f32 %v737, %v1250
        %v1267 = vmul.f32 %v870, %v1235
        %v1268 = vmul.f32 %v871, %v1236
        %v1269 = vmul.f32 %v872, %v1237
        %v1270 = vmul.f32 %v873, %v1238
        %v1271 = vmul.f32 %v874, %v1239
        %v1272 = vmul.f32 %v875, %v1240
        %v1273 = vmul.f32 %v876, %v1241
        %v1274 = vmul.f32 %v877, %v1242
        %v1275 = vmul.f32 %v878, %v1243
        %v1276 = vmul.f32 %v879, %v1244
        %v1277 = vmul.f32 %v880, %v1245
        %v1278 = vmul.f32 %v881, %v1246
        %v1279 = vmul.f32 %v882, %v1247
        %v1280 = vmul.f32 %v883, %v1248
        %v1281 = vmul.f32 %v884, %v1249
        %v1282 = vmul.f32 %v885, %v1250
        %v1283 = vmul.f32 %v1018, %v1235
        %v1284 = vmul.f32 %v1019, %v1236
        %v1285 = vmul.f32 %v1020, %v1237
        %v1286 = vmul.f32 %v1021, %v1238
        %v1287 = vmul.f32 %v1022, %v1239
        %v1288 = vmul.f32 %v1023, %v1240
        %v1289 = vmul.f32 %v1024, %v1241
        %v1290 = vmul.f32 %v1025, %v1242
        %v1291 = vmul.f32 %v1026, %v1243
        %v1292 = vmul.f32 %v1027, %v1244
        %v1293 = vmul.f32 %v1028, %v1245
        %v1294 = vmul.f32 %v1029, %v1246
        %v1295 = vmul.f32 %v1030, %v1247
        %v1296 = vmul.f32 %v1031, %v1248
        %v1297 = vmul.f32 %v1032, %v1249
        %v1298 = vmul.f32 %v1033, %v1250
        %1300 = vset.pattern.permute.xlu0 0
        %1301 = vperm.xlu0 %1300, %v557
        %v1302 = vpop.permute.xlu0 %1301
        %1305 = vset.pattern.permute.xlu0 0
        %1306 = vperm.xlu0 %1305, %v558
        %v1307 = vpop.permute.xlu0 %1306
        %1310 = vset.pattern.permute.xlu0 0
        %1311 = vperm.xlu0 %1310, %v559
        %v1312 = vpop.permute.xlu0 %1311
        %1315 = vset.pattern.permute.xlu0 0
        %1316 = vperm.xlu0 %1315, %v560
        %v1317 = vpop.permute.xlu0 %1316
        %1320 = vset.pattern.permute.xlu0 0
        %1321 = vperm.xlu0 %1320, %v561
        %v1322 = vpop.permute.xlu0 %1321
        %1325 = vset.pattern.permute.xlu0 0
        %1326 = vperm.xlu0 %1325, %v562
        %v1327 = vpop.permute.xlu0 %1326
        %1330 = vset.pattern.permute.xlu0 0
        %1331 = vperm.xlu0 %1330, %v563
        %v1332 = vpop.permute.xlu0 %1331
        %1335 = vset.pattern.permute.xlu0 0
        %1336 = vperm.xlu0 %1335, %v564
        %v1337 = vpop.permute.xlu0 %1336
        %1340 = vset.pattern.permute.xlu0 0
        %1341 = vperm.xlu0 %1340, %v565
        %v1342 = vpop.permute.xlu0 %1341
        %1345 = vset.pattern.permute.xlu0 0
        %1346 = vperm.xlu0 %1345, %v566
        %v1347 = vpop.permute.xlu0 %1346
        %1350 = vset.pattern.permute.xlu0 0
        %1351 = vperm.xlu0 %1350, %v567
        %v1352 = vpop.permute.xlu0 %1351
        %1355 = vset.pattern.permute.xlu0 0
        %1356 = vperm.xlu0 %1355, %v568
        %v1357 = vpop.permute.xlu0 %1356
        %1360 = vset.pattern.permute.xlu0 0
        %1361 = vperm.xlu0 %1360, %v569
        %v1362 = vpop.permute.xlu0 %1361
        %1365 = vset.pattern.permute.xlu0 0
        %1366 = vperm.xlu0 %1365, %v570
        %v1367 = vpop.permute.xlu0 %1366
        %1370 = vset.pattern.permute.xlu0 0
        %1371 = vperm.xlu0 %1370, %v571
        %v1372 = vpop.permute.xlu0 %1371
        %1375 = vset.pattern.permute.xlu0 0
        %1376 = vperm.xlu0 %1375, %v572
        %v1377 = vpop.permute.xlu0 %1376
        %v1379 = vlaneseq
        %v1380 = vshrl.u32 %v1379, 7
        %v1381 = vsub.s32 0, %v1380
        %v1382 = vrot.slane %v573, %v1381
        %v1383 = vsub.f32 %v1302, %v1382
        %v1384 = vsub.f32 %v1307, %v1382
        %v1385 = vsub.f32 %v1312, %v1382
        %v1386 = vsub.f32 %v1317, %v1382
        %v1387 = vsub.f32 %v1322, %v1382
        %v1388 = vsub.f32 %v1327, %v1382
        %v1389 = vsub.f32 %v1332, %v1382
        %v1390 = vsub.f32 %v1337, %v1382
        %v1391 = vsub.f32 %v1342, %v1382
        %v1392 = vsub.f32 %v1347, %v1382
        %v1393 = vsub.f32 %v1352, %v1382
        %v1394 = vsub.f32 %v1357, %v1382
        %v1395 = vsub.f32 %v1362, %v1382
        %v1396 = vsub.f32 %v1367, %v1382
        %v1397 = vsub.f32 %v1372, %v1382
        %v1398 = vsub.f32 %v1377, %v1382
        %1399 = vset.pattern.permute.xlu0 1
        %1400 = vperm.xlu0 %1399, %v557
        %v1401 = vpop.permute.xlu0 %1400
        %1403 = vset.pattern.permute.xlu0 1
        %1404 = vperm.xlu0 %1403, %v558
        %v1405 = vpop.permute.xlu0 %1404
        %1407 = vset.pattern.permute.xlu0 1
        %1408 = vperm.xlu0 %1407, %v559
        %v1409 = vpop.permute.xlu0 %1408
        %1411 = vset.pattern.permute.xlu0 1
        %1412 = vperm.xlu0 %1411, %v560
        %v1413 = vpop.permute.xlu0 %1412
        %1415 = vset.pattern.permute.xlu0 1
        %1416 = vperm.xlu0 %1415, %v561
        %v1417 = vpop.permute.xlu0 %1416
        %1419 = vset.pattern.permute.xlu0 1
        %1420 = vperm.xlu0 %1419, %v562
        %v1421 = vpop.permute.xlu0 %1420
        %1423 = vset.pattern.permute.xlu0 1
        %1424 = vperm.xlu0 %1423, %v563
        %v1425 = vpop.permute.xlu0 %1424
        %1427 = vset.pattern.permute.xlu0 1
        %1428 = vperm.xlu0 %1427, %v564
        %v1429 = vpop.permute.xlu0 %1428
        %1431 = vset.pattern.permute.xlu0 1
        %1432 = vperm.xlu0 %1431, %v565
        %v1433 = vpop.permute.xlu0 %1432
        %1435 = vset.pattern.permute.xlu0 1
        %1436 = vperm.xlu0 %1435, %v566
        %v1437 = vpop.permute.xlu0 %1436
        %1439 = vset.pattern.permute.xlu0 1
        %1440 = vperm.xlu0 %1439, %v567
        %v1441 = vpop.permute.xlu0 %1440
        %1443 = vset.pattern.permute.xlu0 1
        %1444 = vperm.xlu0 %1443, %v568
        %v1445 = vpop.permute.xlu0 %1444
        %1447 = vset.pattern.permute.xlu0 1
        %1448 = vperm.xlu0 %1447, %v569
        %v1449 = vpop.permute.xlu0 %1448
        %1451 = vset.pattern.permute.xlu0 1
        %1452 = vperm.xlu0 %1451, %v570
        %v1453 = vpop.permute.xlu0 %1452
        %1455 = vset.pattern.permute.xlu0 1
        %1456 = vperm.xlu0 %1455, %v571
        %v1457 = vpop.permute.xlu0 %1456
        %1459 = vset.pattern.permute.xlu0 1
        %1460 = vperm.xlu0 %1459, %v572
        %v1461 = vpop.permute.xlu0 %1460
        %v1463 = vlaneseq
        %v1464 = vshrl.u32 %v1463, 7
        %v1465 = vsub.s32 1, %v1464
        %v1466 = vrot.slane %v573, %v1465
        %v1467 = vsub.f32 %v1401, %v1466
        %v1468 = vsub.f32 %v1405, %v1466
        %v1469 = vsub.f32 %v1409, %v1466
        %v1470 = vsub.f32 %v1413, %v1466
        %v1471 = vsub.f32 %v1417, %v1466
        %v1472 = vsub.f32 %v1421, %v1466
        %v1473 = vsub.f32 %v1425, %v1466
        %v1474 = vsub.f32 %v1429, %v1466
        %v1475 = vsub.f32 %v1433, %v1466
        %v1476 = vsub.f32 %v1437, %v1466
        %v1477 = vsub.f32 %v1441, %v1466
        %v1478 = vsub.f32 %v1445, %v1466
        %v1479 = vsub.f32 %v1449, %v1466
        %v1480 = vsub.f32 %v1453, %v1466
        %v1481 = vsub.f32 %v1457, %v1466
        %v1482 = vsub.f32 %v1461, %v1466
        %1483 = vset.pattern.permute.xlu0 2
        %1484 = vperm.xlu0 %1483, %v557
        %v1485 = vpop.permute.xlu0 %1484
        %1487 = vset.pattern.permute.xlu0 2
        %1488 = vperm.xlu0 %1487, %v558
        %v1489 = vpop.permute.xlu0 %1488
        %1491 = vset.pattern.permute.xlu0 2
        %1492 = vperm.xlu0 %1491, %v559
        %v1493 = vpop.permute.xlu0 %1492
        %1495 = vset.pattern.permute.xlu0 2
        %1496 = vperm.xlu0 %1495, %v560
        %v1497 = vpop.permute.xlu0 %1496
        %1499 = vset.pattern.permute.xlu0 2
        %1500 = vperm.xlu0 %1499, %v561
        %v1501 = vpop.permute.xlu0 %1500
        %1503 = vset.pattern.permute.xlu0 2
        %1504 = vperm.xlu0 %1503, %v562
        %v1505 = vpop.permute.xlu0 %1504
        %1507 = vset.pattern.permute.xlu0 2
        %1508 = vperm.xlu0 %1507, %v563
        %v1509 = vpop.permute.xlu0 %1508
        %1511 = vset.pattern.permute.xlu0 2
        %1512 = vperm.xlu0 %1511, %v564
        %v1513 = vpop.permute.xlu0 %1512
        %1515 = vset.pattern.permute.xlu0 2
        %1516 = vperm.xlu0 %1515, %v565
        %v1517 = vpop.permute.xlu0 %1516
        %1519 = vset.pattern.permute.xlu0 2
        %1520 = vperm.xlu0 %1519, %v566
        %v1521 = vpop.permute.xlu0 %1520
        %1523 = vset.pattern.permute.xlu0 2
        %1524 = vperm.xlu0 %1523, %v567
        %v1525 = vpop.permute.xlu0 %1524
        %1527 = vset.pattern.permute.xlu0 2
        %1528 = vperm.xlu0 %1527, %v568
        %v1529 = vpop.permute.xlu0 %1528
        %1531 = vset.pattern.permute.xlu0 2
        %1532 = vperm.xlu0 %1531, %v569
        %v1533 = vpop.permute.xlu0 %1532
        %1535 = vset.pattern.permute.xlu0 2
        %1536 = vperm.xlu0 %1535, %v570
        %v1537 = vpop.permute.xlu0 %1536
        %1539 = vset.pattern.permute.xlu0 2
        %1540 = vperm.xlu0 %1539, %v571
        %v1541 = vpop.permute.xlu0 %1540
        %1543 = vset.pattern.permute.xlu0 2
        %1544 = vperm.xlu0 %1543, %v572
        %v1545 = vpop.permute.xlu0 %1544
        %v1547 = vlaneseq
        %v1548 = vshrl.u32 %v1547, 7
        %v1549 = vsub.s32 2, %v1548
        %v1550 = vrot.slane %v573, %v1549
        %v1551 = vsub.f32 %v1485, %v1550
        %v1552 = vsub.f32 %v1489, %v1550
        %v1553 = vsub.f32 %v1493, %v1550
        %v1554 = vsub.f32 %v1497, %v1550
        %v1555 = vsub.f32 %v1501, %v1550
        %v1556 = vsub.f32 %v1505, %v1550
        %v1557 = vsub.f32 %v1509, %v1550
        %v1558 = vsub.f32 %v1513, %v1550
        %v1559 = vsub.f32 %v1517, %v1550
        %v1560 = vsub.f32 %v1521, %v1550
        %v1561 = vsub.f32 %v1525, %v1550
        %v1562 = vsub.f32 %v1529, %v1550
        %v1563 = vsub.f32 %v1533, %v1550
        %v1564 = vsub.f32 %v1537, %v1550
        %v1565 = vsub.f32 %v1541, %v1550
        %v1566 = vsub.f32 %v1545, %v1550
        %v1567 = vmul.f32 %v1383, %v1251
        %v1568 = vmul.f32 %v1384, %v1252
        %v1569 = vmul.f32 %v1385, %v1253
        %v1570 = vmul.f32 %v1386, %v1254
        %v1571 = vmul.f32 %v1387, %v1255
        %v1572 = vmul.f32 %v1388, %v1256
        %v1573 = vmul.f32 %v1389, %v1257
        %v1574 = vmul.f32 %v1390, %v1258
        %v1575 = vmul.f32 %v1391, %v1259
        %v1576 = vmul.f32 %v1392, %v1260
        %v1577 = vmul.f32 %v1393, %v1261
        %v1578 = vmul.f32 %v1394, %v1262
        %v1579 = vmul.f32 %v1395, %v1263
        %v1580 = vmul.f32 %v1396, %v1264
        %v1581 = vmul.f32 %v1397, %v1265
        %v1582 = vmul.f32 %v1398, %v1266
        %v1583 = vmul.f32 %v1467, %v1267
        %v1584 = vmul.f32 %v1468, %v1268
        %v1585 = vmul.f32 %v1469, %v1269
        %v1586 = vmul.f32 %v1470, %v1270
        %v1587 = vmul.f32 %v1471, %v1271
        %v1588 = vmul.f32 %v1472, %v1272
        %v1589 = vmul.f32 %v1473, %v1273
        %v1590 = vmul.f32 %v1474, %v1274
        %v1591 = vmul.f32 %v1475, %v1275
        %v1592 = vmul.f32 %v1476, %v1276
        %v1593 = vmul.f32 %v1477, %v1277
        %v1594 = vmul.f32 %v1478, %v1278
        %v1595 = vmul.f32 %v1479, %v1279
        %v1596 = vmul.f32 %v1480, %v1280
        %v1597 = vmul.f32 %v1481, %v1281
        %v1598 = vmul.f32 %v1482, %v1282
        %v1599 = vadd.f32 %v1567, %v1583
        %v1600 = vadd.f32 %v1568, %v1584
        %v1601 = vadd.f32 %v1569, %v1585
        %v1602 = vadd.f32 %v1570, %v1586
        %v1603 = vadd.f32 %v1571, %v1587
        %v1604 = vadd.f32 %v1572, %v1588
        %v1605 = vadd.f32 %v1573, %v1589
        %v1606 = vadd.f32 %v1574, %v1590
        %v1607 = vadd.f32 %v1575, %v1591
        %v1608 = vadd.f32 %v1576, %v1592
        %v1609 = vadd.f32 %v1577, %v1593
        %v1610 = vadd.f32 %v1578, %v1594
        %v1611 = vadd.f32 %v1579, %v1595
        %v1612 = vadd.f32 %v1580, %v1596
        %v1613 = vadd.f32 %v1581, %v1597
        %v1614 = vadd.f32 %v1582, %v1598
        %v1615 = vmul.f32 %v1551, %v1283
        %v1616 = vmul.f32 %v1552, %v1284
        %v1617 = vmul.f32 %v1553, %v1285
        %v1618 = vmul.f32 %v1554, %v1286
        %v1619 = vmul.f32 %v1555, %v1287
        %v1620 = vmul.f32 %v1556, %v1288
        %v1621 = vmul.f32 %v1557, %v1289
        %v1622 = vmul.f32 %v1558, %v1290
        %v1623 = vmul.f32 %v1559, %v1291
        %v1624 = vmul.f32 %v1560, %v1292
        %v1625 = vmul.f32 %v1561, %v1293
        %v1626 = vmul.f32 %v1562, %v1294
        %v1627 = vmul.f32 %v1563, %v1295
        %v1628 = vmul.f32 %v1564, %v1296
        %v1629 = vmul.f32 %v1565, %v1297
        %v1630 = vmul.f32 %v1566, %v1298
        %v1631 = vadd.f32 %v1599, %v1615
        %v1632 = vadd.f32 %v1600, %v1616
        %v1633 = vadd.f32 %v1601, %v1617
        %v1634 = vadd.f32 %v1602, %v1618
        %v1635 = vadd.f32 %v1603, %v1619
        %v1636 = vadd.f32 %v1604, %v1620
        %v1637 = vadd.f32 %v1605, %v1621
        %v1638 = vadd.f32 %v1606, %v1622
        %v1639 = vadd.f32 %v1607, %v1623
        %v1640 = vadd.f32 %v1608, %v1624
        %v1641 = vadd.f32 %v1609, %v1625
        %v1642 = vadd.f32 %v1610, %v1626
        %v1643 = vadd.f32 %v1611, %v1627
        %v1644 = vadd.f32 %v1612, %v1628
        %v1645 = vadd.f32 %v1613, %v1629
        %v1646 = vadd.f32 %v1614, %v1630
        %v1647 = vmul.f32 %v1631, %v1251
        %v1648 = vmul.f32 %v1632, %v1252
        %v1649 = vmul.f32 %v1633, %v1253
        %v1650 = vmul.f32 %v1634, %v1254
        %v1651 = vmul.f32 %v1635, %v1255
        %v1652 = vmul.f32 %v1636, %v1256
        %v1653 = vmul.f32 %v1637, %v1257
        %v1654 = vmul.f32 %v1638, %v1258
        %v1655 = vmul.f32 %v1639, %v1259
        %v1656 = vmul.f32 %v1640, %v1260
        %v1657 = vmul.f32 %v1641, %v1261
        %v1658 = vmul.f32 %v1642, %v1262
        %v1659 = vmul.f32 %v1643, %v1263
        %v1660 = vmul.f32 %v1644, %v1264
        %v1661 = vmul.f32 %v1645, %v1265
        %v1662 = vmul.f32 %v1646, %v1266
        %v1663 = vmul.f32 %v1631, %v1267
        %v1664 = vmul.f32 %v1632, %v1268
        %v1665 = vmul.f32 %v1633, %v1269
        %v1666 = vmul.f32 %v1634, %v1270
        %v1667 = vmul.f32 %v1635, %v1271
        %v1668 = vmul.f32 %v1636, %v1272
        %v1669 = vmul.f32 %v1637, %v1273
        %v1670 = vmul.f32 %v1638, %v1274
        %v1671 = vmul.f32 %v1639, %v1275
        %v1672 = vmul.f32 %v1640, %v1276
        %v1673 = vmul.f32 %v1641, %v1277
        %v1674 = vmul.f32 %v1642, %v1278
        %v1675 = vmul.f32 %v1643, %v1279
        %v1676 = vmul.f32 %v1644, %v1280
        %v1677 = vmul.f32 %v1645, %v1281
        %v1678 = vmul.f32 %v1646, %v1282
        %v1679 = vmul.f32 %v1631, %v1283
        %v1680 = vmul.f32 %v1632, %v1284
        %v1681 = vmul.f32 %v1633, %v1285
        %v1682 = vmul.f32 %v1634, %v1286
        %v1683 = vmul.f32 %v1635, %v1287
        %v1684 = vmul.f32 %v1636, %v1288
        %v1685 = vmul.f32 %v1637, %v1289
        %v1686 = vmul.f32 %v1638, %v1290
        %v1687 = vmul.f32 %v1639, %v1291
        %v1688 = vmul.f32 %v1640, %v1292
        %v1689 = vmul.f32 %v1641, %v1293
        %v1690 = vmul.f32 %v1642, %v1294
        %v1691 = vmul.f32 %v1643, %v1295
        %v1692 = vmul.f32 %v1644, %v1296
        %v1693 = vmul.f32 %v1645, %v1297
        %v1694 = vmul.f32 %v1646, %v1298
        %v1695 = vsub.f32 %v1383, %v1647
        %v1696 = vsub.f32 %v1384, %v1648
        %v1697 = vsub.f32 %v1385, %v1649
        %v1698 = vsub.f32 %v1386, %v1650
        %v1699 = vsub.f32 %v1387, %v1651
        %v1700 = vsub.f32 %v1388, %v1652
        %v1701 = vsub.f32 %v1389, %v1653
        %v1702 = vsub.f32 %v1390, %v1654
        %v1703 = vsub.f32 %v1391, %v1655
        %v1704 = vsub.f32 %v1392, %v1656
        %v1705 = vsub.f32 %v1393, %v1657
        %v1706 = vsub.f32 %v1394, %v1658
        %v1707 = vsub.f32 %v1395, %v1659
        %v1708 = vsub.f32 %v1396, %v1660
        %v1709 = vsub.f32 %v1397, %v1661
        %v1710 = vsub.f32 %v1398, %v1662
        %v1711 = vsub.f32 %v1467, %v1663
        %v1712 = vsub.f32 %v1468, %v1664
        %v1713 = vsub.f32 %v1469, %v1665
        %v1714 = vsub.f32 %v1470, %v1666
        %v1715 = vsub.f32 %v1471, %v1667
        %v1716 = vsub.f32 %v1472, %v1668
        %v1717 = vsub.f32 %v1473, %v1669
        %v1718 = vsub.f32 %v1474, %v1670
        %v1719 = vsub.f32 %v1475, %v1671
        %v1720 = vsub.f32 %v1476, %v1672
        %v1721 = vsub.f32 %v1477, %v1673
        %v1722 = vsub.f32 %v1478, %v1674
        %v1723 = vsub.f32 %v1479, %v1675
        %v1724 = vsub.f32 %v1480, %v1676
        %v1725 = vsub.f32 %v1481, %v1677
        %v1726 = vsub.f32 %v1482, %v1678
        %v1727 = vsub.f32 %v1551, %v1679
        %v1728 = vsub.f32 %v1552, %v1680
        %v1729 = vsub.f32 %v1553, %v1681
        %v1730 = vsub.f32 %v1554, %v1682
        %v1731 = vsub.f32 %v1555, %v1683
        %v1732 = vsub.f32 %v1556, %v1684
        %v1733 = vsub.f32 %v1557, %v1685
        %v1734 = vsub.f32 %v1558, %v1686
        %v1735 = vsub.f32 %v1559, %v1687
        %v1736 = vsub.f32 %v1560, %v1688
        %v1737 = vsub.f32 %v1561, %v1689
        %v1738 = vsub.f32 %v1562, %v1690
        %v1739 = vsub.f32 %v1563, %v1691
        %v1740 = vsub.f32 %v1564, %v1692
        %v1741 = vsub.f32 %v1565, %v1693
        %v1742 = vsub.f32 %v1566, %v1694
        %v1743 = vmul.f32 %v1695, %v1695
        %v1744 = vmul.f32 %v1696, %v1696
        %v1745 = vmul.f32 %v1697, %v1697
        %v1746 = vmul.f32 %v1698, %v1698
        %v1747 = vmul.f32 %v1699, %v1699
        %v1748 = vmul.f32 %v1700, %v1700
        %v1749 = vmul.f32 %v1701, %v1701
        %v1750 = vmul.f32 %v1702, %v1702
        %v1751 = vmul.f32 %v1703, %v1703
        %v1752 = vmul.f32 %v1704, %v1704
        %v1753 = vmul.f32 %v1705, %v1705
        %v1754 = vmul.f32 %v1706, %v1706
        %v1755 = vmul.f32 %v1707, %v1707
        %v1756 = vmul.f32 %v1708, %v1708
        %v1757 = vmul.f32 %v1709, %v1709
        %v1758 = vmul.f32 %v1710, %v1710
        %v1759 = vmul.f32 %v1711, %v1711
        %v1760 = vmul.f32 %v1712, %v1712
        %v1761 = vmul.f32 %v1713, %v1713
        %v1762 = vmul.f32 %v1714, %v1714
        %v1763 = vmul.f32 %v1715, %v1715
        %v1764 = vmul.f32 %v1716, %v1716
        %v1765 = vmul.f32 %v1717, %v1717
        %v1766 = vmul.f32 %v1718, %v1718
        %v1767 = vmul.f32 %v1719, %v1719
        %v1768 = vmul.f32 %v1720, %v1720
        %v1769 = vmul.f32 %v1721, %v1721
        %v1770 = vmul.f32 %v1722, %v1722
        %v1771 = vmul.f32 %v1723, %v1723
        %v1772 = vmul.f32 %v1724, %v1724
        %v1773 = vmul.f32 %v1725, %v1725
        %v1774 = vmul.f32 %v1726, %v1726
        %v1775 = vadd.f32 %v1743, %v1759
        %v1776 = vadd.f32 %v1744, %v1760
        %v1777 = vadd.f32 %v1745, %v1761
        %v1778 = vadd.f32 %v1746, %v1762
        %v1779 = vadd.f32 %v1747, %v1763
        %v1780 = vadd.f32 %v1748, %v1764
        %v1781 = vadd.f32 %v1749, %v1765
        %v1782 = vadd.f32 %v1750, %v1766
        %v1783 = vadd.f32 %v1751, %v1767
        %v1784 = vadd.f32 %v1752, %v1768
        %v1785 = vadd.f32 %v1753, %v1769
        %v1786 = vadd.f32 %v1754, %v1770
        %v1787 = vadd.f32 %v1755, %v1771
        %v1788 = vadd.f32 %v1756, %v1772
        %v1789 = vadd.f32 %v1757, %v1773
        %v1790 = vadd.f32 %v1758, %v1774
        %v1791 = vmul.f32 %v1727, %v1727
        %v1792 = vmul.f32 %v1728, %v1728
        %v1793 = vmul.f32 %v1729, %v1729
        %v1794 = vmul.f32 %v1730, %v1730
        %v1795 = vmul.f32 %v1731, %v1731
        %v1796 = vmul.f32 %v1732, %v1732
        %v1797 = vmul.f32 %v1733, %v1733
        %v1798 = vmul.f32 %v1734, %v1734
        %v1799 = vmul.f32 %v1735, %v1735
        %v1800 = vmul.f32 %v1736, %v1736
        %v1801 = vmul.f32 %v1737, %v1737
        %v1802 = vmul.f32 %v1738, %v1738
        %v1803 = vmul.f32 %v1739, %v1739
        %v1804 = vmul.f32 %v1740, %v1740
        %v1805 = vmul.f32 %v1741, %v1741
        %v1806 = vmul.f32 %v1742, %v1742
        %v1807 = vadd.f32 %v1775, %v1791
        %v1808 = vadd.f32 %v1776, %v1792
        %v1809 = vadd.f32 %v1777, %v1793
        %v1810 = vadd.f32 %v1778, %v1794
        %v1811 = vadd.f32 %v1779, %v1795
        %v1812 = vadd.f32 %v1780, %v1796
        %v1813 = vadd.f32 %v1781, %v1797
        %v1814 = vadd.f32 %v1782, %v1798
        %v1815 = vadd.f32 %v1783, %v1799
        %v1816 = vadd.f32 %v1784, %v1800
        %v1817 = vadd.f32 %v1785, %v1801
        %v1818 = vadd.f32 %v1786, %v1802
        %v1819 = vadd.f32 %v1787, %v1803
        %v1820 = vadd.f32 %v1788, %v1804
        %v1821 = vadd.f32 %v1789, %v1805
        %v1822 = vadd.f32 %v1790, %v1806
        %v1823 = vsel %vm1203, %v1807, 1.0
        %v1824 = vsel %vm1204, %v1808, 1.0
        %v1825 = vsel %vm1205, %v1809, 1.0
        %v1826 = vsel %vm1206, %v1810, 1.0
        %v1827 = vsel %vm1207, %v1811, 1.0
        %v1828 = vsel %vm1208, %v1812, 1.0
        %v1829 = vsel %vm1209, %v1813, 1.0
        %v1830 = vsel %vm1210, %v1814, 1.0
        %v1831 = vsel %vm1211, %v1815, 1.0
        %v1832 = vsel %vm1212, %v1816, 1.0
        %v1833 = vsel %vm1213, %v1817, 1.0
        %v1834 = vsel %vm1214, %v1818, 1.0
        %v1835 = vsel %vm1215, %v1819, 1.0
        %v1836 = vsel %vm1216, %v1820, 1.0
        %v1837 = vsel %vm1217, %v1821, 1.0
        %v1838 = vsel %vm1218, %v1822, 1.0
        %v1839 = vrsqrt.pop %v1823
        %v1840 = vrsqrt.pop %v1824
        %v1841 = vrsqrt.pop %v1825
        %v1842 = vrsqrt.pop %v1826
        %v1843 = vrsqrt.pop %v1827
        %v1844 = vrsqrt.pop %v1828
        %v1845 = vrsqrt.pop %v1829
        %v1846 = vrsqrt.pop %v1830
        %v1847 = vrsqrt.pop %v1831
        %v1848 = vrsqrt.pop %v1832
        %v1849 = vrsqrt.pop %v1833
        %v1850 = vrsqrt.pop %v1834
        %v1851 = vrsqrt.pop %v1835
        %v1852 = vrsqrt.pop %v1836
        %v1853 = vrsqrt.pop %v1837
        %v1854 = vrsqrt.pop %v1838
        %v1855 = vld [vmem:[%s401] sm:$0xff]
        %v1856 = vld [vmem:[%s401 + $0x8] sm:$0xff]
        %v1857 = vld [vmem:[%s401 + $0x10] sm:$0xff]
        %v1858 = vld [vmem:[%s401 + $0x18] sm:$0xff]
        %v1859 = vld [vmem:[%s401 + $0x20] sm:$0xff]
        %v1860 = vld [vmem:[%s401 + $0x28] sm:$0xff]
        %v1861 = vld [vmem:[%s401 + $0x30] sm:$0xff]
        %v1862 = vld [vmem:[%s401 + $0x38] sm:$0xff]
        %v1863 = vld [vmem:[%s401 + $0x40] sm:$0xff]
        %v1864 = vld [vmem:[%s401 + $0x48] sm:$0xff]
        %v1865 = vld [vmem:[%s401 + $0x50] sm:$0xff]
        %v1866 = vld [vmem:[%s401 + $0x58] sm:$0xff]
        %v1867 = vld [vmem:[%s401 + $0x60] sm:$0xff]
        %v1868 = vld [vmem:[%s401 + $0x68] sm:$0xff]
        %v1869 = vld [vmem:[%s401 + $0x70] sm:$0xff]
        %v1870 = vld [vmem:[%s401 + $0x78] sm:$0xff]
        %v1871 = vmul.f32 %v1855, 4.8832664
        %v1872 = vmul.f32 %v1856, 4.8832664
        %v1873 = vmul.f32 %v1857, 4.8832664
        %v1874 = vmul.f32 %v1858, 4.8832664
        %v1875 = vmul.f32 %v1859, 4.8832664
        %v1876 = vmul.f32 %v1860, 4.8832664
        %v1877 = vmul.f32 %v1861, 4.8832664
        %v1878 = vmul.f32 %v1862, 4.8832664
        %v1879 = vmul.f32 %v1863, 4.8832664
        %v1880 = vmul.f32 %v1864, 4.8832664
        %v1881 = vmul.f32 %v1865, 4.8832664
        %v1882 = vmul.f32 %v1866, 4.8832664
        %v1883 = vmul.f32 %v1867, 4.8832664
        %v1884 = vmul.f32 %v1868, 4.8832664
        %v1885 = vmul.f32 %v1869, 4.8832664
        %v1886 = vmul.f32 %v1870, 4.8832664
        %v1887 = vld [vmem:[%s409] sm:$0xff]
        %v1888 = vld [vmem:[%s409 + $0x8] sm:$0xff]
        %v1889 = vld [vmem:[%s409 + $0x10] sm:$0xff]
        %v1890 = vld [vmem:[%s409 + $0x18] sm:$0xff]
        %v1891 = vld [vmem:[%s409 + $0x20] sm:$0xff]
        %v1892 = vld [vmem:[%s409 + $0x28] sm:$0xff]
        %v1893 = vld [vmem:[%s409 + $0x30] sm:$0xff]
        %v1894 = vld [vmem:[%s409 + $0x38] sm:$0xff]
        %v1895 = vld [vmem:[%s409 + $0x40] sm:$0xff]
        %v1896 = vld [vmem:[%s409 + $0x48] sm:$0xff]
        %v1897 = vld [vmem:[%s409 + $0x50] sm:$0xff]
        %v1898 = vld [vmem:[%s409 + $0x58] sm:$0xff]
        %v1899 = vld [vmem:[%s409 + $0x60] sm:$0xff]
        %v1900 = vld [vmem:[%s409 + $0x68] sm:$0xff]
        %v1901 = vld [vmem:[%s409 + $0x70] sm:$0xff]
        %v1902 = vld [vmem:[%s409 + $0x78] sm:$0xff]
        %v1903 = vmul.f32 %v1887, 6.9059815
        %v1904 = vmul.f32 %v1888, 6.9059815
        %v1905 = vmul.f32 %v1889, 6.9059815
        %v1906 = vmul.f32 %v1890, 6.9059815
        %v1907 = vmul.f32 %v1891, 6.9059815
        %v1908 = vmul.f32 %v1892, 6.9059815
        %v1909 = vmul.f32 %v1893, 6.9059815
        %v1910 = vmul.f32 %v1894, 6.9059815
        %v1911 = vmul.f32 %v1895, 6.9059815
        %v1912 = vmul.f32 %v1896, 6.9059815
        %v1913 = vmul.f32 %v1897, 6.9059815
        %v1914 = vmul.f32 %v1898, 6.9059815
        %v1915 = vmul.f32 %v1899, 6.9059815
        %v1916 = vmul.f32 %v1900, 6.9059815
        %v1917 = vmul.f32 %v1901, 6.9059815
        %v1918 = vmul.f32 %v1902, 6.9059815
        %v1919 = vmul.f32 %v1903, %v1839
        %v1920 = vmul.f32 %v1904, %v1840
        %v1921 = vmul.f32 %v1905, %v1841
        %v1922 = vmul.f32 %v1906, %v1842
        %v1923 = vmul.f32 %v1907, %v1843
        %v1924 = vmul.f32 %v1908, %v1844
        %v1925 = vmul.f32 %v1909, %v1845
        %v1926 = vmul.f32 %v1910, %v1846
        %v1927 = vmul.f32 %v1911, %v1847
        %v1928 = vmul.f32 %v1912, %v1848
        %v1929 = vmul.f32 %v1913, %v1849
        %v1930 = vmul.f32 %v1914, %v1850
        %v1931 = vmul.f32 %v1915, %v1851
        %v1932 = vmul.f32 %v1916, %v1852
        %v1933 = vmul.f32 %v1917, %v1853
        %v1934 = vmul.f32 %v1918, %v1854
        %v1935 = vsub.f32 %v1919, 0.1
        %v1936 = vsub.f32 %v1920, 0.1
        %v1937 = vsub.f32 %v1921, 0.1
        %v1938 = vsub.f32 %v1922, 0.1
        %v1939 = vsub.f32 %v1923, 0.1
        %v1940 = vsub.f32 %v1924, 0.1
        %v1941 = vsub.f32 %v1925, 0.1
        %v1942 = vsub.f32 %v1926, 0.1
        %v1943 = vsub.f32 %v1927, 0.1
        %v1944 = vsub.f32 %v1928, 0.1
        %v1945 = vsub.f32 %v1929, 0.1
        %v1946 = vsub.f32 %v1930, 0.1
        %v1947 = vsub.f32 %v1931, 0.1
        %v1948 = vsub.f32 %v1932, 0.1
        %v1949 = vsub.f32 %v1933, 0.1
        %v1950 = vsub.f32 %v1934, 0.1
        %v1951 = vsel %vm1203, 1, 0
        %v1952 = vsel %vm1204, 1, 0
        %v1953 = vsel %vm1205, 1, 0
        %v1954 = vsel %vm1206, 1, 0
        %v1955 = vsel %vm1207, 1, 0
        %v1956 = vsel %vm1208, 1, 0
        %v1957 = vsel %vm1209, 1, 0
        %v1958 = vsel %vm1210, 1, 0
        %v1959 = vsel %vm1211, 1, 0
        %v1960 = vsel %vm1212, 1, 0
        %v1961 = vsel %vm1213, 1, 0
        %v1962 = vsel %vm1214, 1, 0
        %v1963 = vsel %vm1215, 1, 0
        %v1964 = vsel %vm1216, 1, 0
        %v1965 = vsel %vm1217, 1, 0
        %v1966 = vsel %vm1218, 1, 0
        %v1967 = vcvt.s32.f32 %v1951
        %v1968 = vcvt.s32.f32 %v1952
        %v1969 = vcvt.s32.f32 %v1953
        %v1970 = vcvt.s32.f32 %v1954
        %v1971 = vcvt.s32.f32 %v1955
        %v1972 = vcvt.s32.f32 %v1956
        %v1973 = vcvt.s32.f32 %v1957
        %v1974 = vcvt.s32.f32 %v1958
        %v1975 = vcvt.s32.f32 %v1959
        %v1976 = vcvt.s32.f32 %v1960
        %v1977 = vcvt.s32.f32 %v1961
        %v1978 = vcvt.s32.f32 %v1962
        %v1979 = vcvt.s32.f32 %v1963
        %v1980 = vcvt.s32.f32 %v1964
        %v1981 = vcvt.s32.f32 %v1965
        %v1982 = vcvt.s32.f32 %v1966
        %v1983 = vmul.f32 %v1871, %v1251
        %v1984 = vmul.f32 %v1872, %v1252
        %v1985 = vmul.f32 %v1873, %v1253
        %v1986 = vmul.f32 %v1874, %v1254
        %v1987 = vmul.f32 %v1875, %v1255
        %v1988 = vmul.f32 %v1876, %v1256
        %v1989 = vmul.f32 %v1877, %v1257
        %v1990 = vmul.f32 %v1878, %v1258
        %v1991 = vmul.f32 %v1879, %v1259
        %v1992 = vmul.f32 %v1880, %v1260
        %v1993 = vmul.f32 %v1881, %v1261
        %v1994 = vmul.f32 %v1882, %v1262
        %v1995 = vmul.f32 %v1883, %v1263
        %v1996 = vmul.f32 %v1884, %v1264
        %v1997 = vmul.f32 %v1885, %v1265
        %v1998 = vmul.f32 %v1886, %v1266
        %v1999 = vmul.f32 %v1935, %v1695
        %v2000 = vmul.f32 %v1936, %v1696
        %v2001 = vmul.f32 %v1937, %v1697
        %v2002 = vmul.f32 %v1938, %v1698
        %v2003 = vmul.f32 %v1939, %v1699
        %v2004 = vmul.f32 %v1940, %v1700
        %v2005 = vmul.f32 %v1941, %v1701
        %v2006 = vmul.f32 %v1942, %v1702
        %v2007 = vmul.f32 %v1943, %v1703
        %v2008 = vmul.f32 %v1944, %v1704
        %v2009 = vmul.f32 %v1945, %v1705
        %v2010 = vmul.f32 %v1946, %v1706
        %v2011 = vmul.f32 %v1947, %v1707
        %v2012 = vmul.f32 %v1948, %v1708
        %v2013 = vmul.f32 %v1949, %v1709
        %v2014 = vmul.f32 %v1950, %v1710
        %v2015 = vadd.f32 %v1983, %v1999
        %v2016 = vadd.f32 %v1984, %v2000
        %v2017 = vadd.f32 %v1985, %v2001
        %v2018 = vadd.f32 %v1986, %v2002
        %v2019 = vadd.f32 %v1987, %v2003
        %v2020 = vadd.f32 %v1988, %v2004
        %v2021 = vadd.f32 %v1989, %v2005
        %v2022 = vadd.f32 %v1990, %v2006
        %v2023 = vadd.f32 %v1991, %v2007
        %v2024 = vadd.f32 %v1992, %v2008
        %v2025 = vadd.f32 %v1993, %v2009
        %v2026 = vadd.f32 %v1994, %v2010
        %v2027 = vadd.f32 %v1995, %v2011
        %v2028 = vadd.f32 %v1996, %v2012
        %v2029 = vadd.f32 %v1997, %v2013
        %v2030 = vadd.f32 %v1998, %v2014
        %v2031 = vmul.f32 %v1647, 0.1
        %v2032 = vmul.f32 %v1648, 0.1
        %v2033 = vmul.f32 %v1649, 0.1
        %v2034 = vmul.f32 %v1650, 0.1
        %v2035 = vmul.f32 %v1651, 0.1
        %v2036 = vmul.f32 %v1652, 0.1
        %v2037 = vmul.f32 %v1653, 0.1
        %v2038 = vmul.f32 %v1654, 0.1
        %v2039 = vmul.f32 %v1655, 0.1
        %v2040 = vmul.f32 %v1656, 0.1
        %v2041 = vmul.f32 %v1657, 0.1
        %v2042 = vmul.f32 %v1658, 0.1
        %v2043 = vmul.f32 %v1659, 0.1
        %v2044 = vmul.f32 %v1660, 0.1
        %v2045 = vmul.f32 %v1661, 0.1
        %v2046 = vmul.f32 %v1662, 0.1
        %v2047 = vsub.f32 %v2015, %v2031
        %v2048 = vsub.f32 %v2016, %v2032
        %v2049 = vsub.f32 %v2017, %v2033
        %v2050 = vsub.f32 %v2018, %v2034
        %v2051 = vsub.f32 %v2019, %v2035
        %v2052 = vsub.f32 %v2020, %v2036
        %v2053 = vsub.f32 %v2021, %v2037
        %v2054 = vsub.f32 %v2022, %v2038
        %v2055 = vsub.f32 %v2023, %v2039
        %v2056 = vsub.f32 %v2024, %v2040
        %v2057 = vsub.f32 %v2025, %v2041
        %v2058 = vsub.f32 %v2026, %v2042
        %v2059 = vsub.f32 %v2027, %v2043
        %v2060 = vsub.f32 %v2028, %v2044
        %v2061 = vsub.f32 %v2029, %v2045
        %v2062 = vsub.f32 %v2030, %v2046
        %v2063 = vmul.f32 %v2047, %v1967
        %v2064 = vmul.f32 %v2048, %v1968
        %v2065 = vmul.f32 %v2049, %v1969
        %v2066 = vmul.f32 %v2050, %v1970
        %v2067 = vmul.f32 %v2051, %v1971
        %v2068 = vmul.f32 %v2052, %v1972
        %v2069 = vmul.f32 %v2053, %v1973
        %v2070 = vmul.f32 %v2054, %v1974
        %v2071 = vmul.f32 %v2055, %v1975
        %v2072 = vmul.f32 %v2056, %v1976
        %v2073 = vmul.f32 %v2057, %v1977
        %v2074 = vmul.f32 %v2058, %v1978
        %v2075 = vmul.f32 %v2059, %v1979
        %v2076 = vmul.f32 %v2060, %v1980
        %v2077 = vmul.f32 %v2061, %v1981
        %v2078 = vmul.f32 %v2062, %v1982
        %v2079 = vmul.f32 %v1871, %v1267
        %v2080 = vmul.f32 %v1872, %v1268
        %v2081 = vmul.f32 %v1873, %v1269
        %v2082 = vmul.f32 %v1874, %v1270
        %v2083 = vmul.f32 %v1875, %v1271
        %v2084 = vmul.f32 %v1876, %v1272
        %v2085 = vmul.f32 %v1877, %v1273
        %v2086 = vmul.f32 %v1878, %v1274
        %v2087 = vmul.f32 %v1879, %v1275
        %v2088 = vmul.f32 %v1880, %v1276
        %v2089 = vmul.f32 %v1881, %v1277
        %v2090 = vmul.f32 %v1882, %v1278
        %v2091 = vmul.f32 %v1883, %v1279
        %v2092 = vmul.f32 %v1884, %v1280
        %v2093 = vmul.f32 %v1885, %v1281
        %v2094 = vmul.f32 %v1886, %v1282
        %v2095 = vmul.f32 %v1935, %v1711
        %v2096 = vmul.f32 %v1936, %v1712
        %v2097 = vmul.f32 %v1937, %v1713
        %v2098 = vmul.f32 %v1938, %v1714
        %v2099 = vmul.f32 %v1939, %v1715
        %v2100 = vmul.f32 %v1940, %v1716
        %v2101 = vmul.f32 %v1941, %v1717
        %v2102 = vmul.f32 %v1942, %v1718
        %v2103 = vmul.f32 %v1943, %v1719
        %v2104 = vmul.f32 %v1944, %v1720
        %v2105 = vmul.f32 %v1945, %v1721
        %v2106 = vmul.f32 %v1946, %v1722
        %v2107 = vmul.f32 %v1947, %v1723
        %v2108 = vmul.f32 %v1948, %v1724
        %v2109 = vmul.f32 %v1949, %v1725
        %v2110 = vmul.f32 %v1950, %v1726
        %v2111 = vadd.f32 %v2079, %v2095
        %v2112 = vadd.f32 %v2080, %v2096
        %v2113 = vadd.f32 %v2081, %v2097
        %v2114 = vadd.f32 %v2082, %v2098
        %v2115 = vadd.f32 %v2083, %v2099
        %v2116 = vadd.f32 %v2084, %v2100
        %v2117 = vadd.f32 %v2085, %v2101
        %v2118 = vadd.f32 %v2086, %v2102
        %v2119 = vadd.f32 %v2087, %v2103
        %v2120 = vadd.f32 %v2088, %v2104
        %v2121 = vadd.f32 %v2089, %v2105
        %v2122 = vadd.f32 %v2090, %v2106
        %v2123 = vadd.f32 %v2091, %v2107
        %v2124 = vadd.f32 %v2092, %v2108
        %v2125 = vadd.f32 %v2093, %v2109
        %v2126 = vadd.f32 %v2094, %v2110
        %v2127 = vmul.f32 %v1663, 0.1
        %v2128 = vmul.f32 %v1664, 0.1
        %v2129 = vmul.f32 %v1665, 0.1
        %v2130 = vmul.f32 %v1666, 0.1
        %v2131 = vmul.f32 %v1667, 0.1
        %v2132 = vmul.f32 %v1668, 0.1
        %v2133 = vmul.f32 %v1669, 0.1
        %v2134 = vmul.f32 %v1670, 0.1
        %v2135 = vmul.f32 %v1671, 0.1
        %v2136 = vmul.f32 %v1672, 0.1
        %v2137 = vmul.f32 %v1673, 0.1
        %v2138 = vmul.f32 %v1674, 0.1
        %v2139 = vmul.f32 %v1675, 0.1
        %v2140 = vmul.f32 %v1676, 0.1
        %v2141 = vmul.f32 %v1677, 0.1
        %v2142 = vmul.f32 %v1678, 0.1
        %v2143 = vsub.f32 %v2111, %v2127
        %v2144 = vsub.f32 %v2112, %v2128
        %v2145 = vsub.f32 %v2113, %v2129
        %v2146 = vsub.f32 %v2114, %v2130
        %v2147 = vsub.f32 %v2115, %v2131
        %v2148 = vsub.f32 %v2116, %v2132
        %v2149 = vsub.f32 %v2117, %v2133
        %v2150 = vsub.f32 %v2118, %v2134
        %v2151 = vsub.f32 %v2119, %v2135
        %v2152 = vsub.f32 %v2120, %v2136
        %v2153 = vsub.f32 %v2121, %v2137
        %v2154 = vsub.f32 %v2122, %v2138
        %v2155 = vsub.f32 %v2123, %v2139
        %v2156 = vsub.f32 %v2124, %v2140
        %v2157 = vsub.f32 %v2125, %v2141
        %v2158 = vsub.f32 %v2126, %v2142
        %v2159 = vmul.f32 %v2143, %v1967
        %v2160 = vmul.f32 %v2144, %v1968
        %v2161 = vmul.f32 %v2145, %v1969
        %v2162 = vmul.f32 %v2146, %v1970
        %v2163 = vmul.f32 %v2147, %v1971
        %v2164 = vmul.f32 %v2148, %v1972
        %v2165 = vmul.f32 %v2149, %v1973
        %v2166 = vmul.f32 %v2150, %v1974
        %v2167 = vmul.f32 %v2151, %v1975
        %v2168 = vmul.f32 %v2152, %v1976
        %v2169 = vmul.f32 %v2153, %v1977
        %v2170 = vmul.f32 %v2154, %v1978
        %v2171 = vmul.f32 %v2155, %v1979
        %v2172 = vmul.f32 %v2156, %v1980
        %v2173 = vmul.f32 %v2157, %v1981
        %v2174 = vmul.f32 %v2158, %v1982
        %v2175 = vmul.f32 %v1871, %v1283
        %v2176 = vmul.f32 %v1872, %v1284
        %v2177 = vmul.f32 %v1873, %v1285
        %v2178 = vmul.f32 %v1874, %v1286
        %v2179 = vmul.f32 %v1875, %v1287
        %v2180 = vmul.f32 %v1876, %v1288
        %v2181 = vmul.f32 %v1877, %v1289
        %v2182 = vmul.f32 %v1878, %v1290
        %v2183 = vmul.f32 %v1879, %v1291
        %v2184 = vmul.f32 %v1880, %v1292
        %v2185 = vmul.f32 %v1881, %v1293
        %v2186 = vmul.f32 %v1882, %v1294
        %v2187 = vmul.f32 %v1883, %v1295
        %v2188 = vmul.f32 %v1884, %v1296
        %v2189 = vmul.f32 %v1885, %v1297
        %v2190 = vmul.f32 %v1886, %v1298
        %v2191 = vmul.f32 %v1935, %v1727
        %v2192 = vmul.f32 %v1936, %v1728
        %v2193 = vmul.f32 %v1937, %v1729
        %v2194 = vmul.f32 %v1938, %v1730
        %v2195 = vmul.f32 %v1939, %v1731
        %v2196 = vmul.f32 %v1940, %v1732
        %v2197 = vmul.f32 %v1941, %v1733
        %v2198 = vmul.f32 %v1942, %v1734
        %v2199 = vmul.f32 %v1943, %v1735
        %v2200 = vmul.f32 %v1944, %v1736
        %v2201 = vmul.f32 %v1945, %v1737
        %v2202 = vmul.f32 %v1946, %v1738
        %v2203 = vmul.f32 %v1947, %v1739
        %v2204 = vmul.f32 %v1948, %v1740
        %v2205 = vmul.f32 %v1949, %v1741
        %v2206 = vmul.f32 %v1950, %v1742
        %v2207 = vadd.f32 %v2175, %v2191
        %v2208 = vadd.f32 %v2176, %v2192
        %v2209 = vadd.f32 %v2177, %v2193
        %v2210 = vadd.f32 %v2178, %v2194
        %v2211 = vadd.f32 %v2179, %v2195
        %v2212 = vadd.f32 %v2180, %v2196
        %v2213 = vadd.f32 %v2181, %v2197
        %v2214 = vadd.f32 %v2182, %v2198
        %v2215 = vadd.f32 %v2183, %v2199
        %v2216 = vadd.f32 %v2184, %v2200
        %v2217 = vadd.f32 %v2185, %v2201
        %v2218 = vadd.f32 %v2186, %v2202
        %v2219 = vadd.f32 %v2187, %v2203
        %v2220 = vadd.f32 %v2188, %v2204
        %v2221 = vadd.f32 %v2189, %v2205
        %v2222 = vadd.f32 %v2190, %v2206
        %v2223 = vmul.f32 %v1679, 0.1
        %v2224 = vmul.f32 %v1680, 0.1
        %v2225 = vmul.f32 %v1681, 0.1
        %v2226 = vmul.f32 %v1682, 0.1
        %v2227 = vmul.f32 %v1683, 0.1
        %v2228 = vmul.f32 %v1684, 0.1
        %v2229 = vmul.f32 %v1685, 0.1
        %v2230 = vmul.f32 %v1686, 0.1
        %v2231 = vmul.f32 %v1687, 0.1
        %v2232 = vmul.f32 %v1688, 0.1
        %v2233 = vmul.f32 %v1689, 0.1
        %v2234 = vmul.f32 %v1690, 0.1
        %v2235 = vmul.f32 %v1691, 0.1
        %v2236 = vmul.f32 %v1692, 0.1
        %v2237 = vmul.f32 %v1693, 0.1
        %v2238 = vmul.f32 %v1694, 0.1
        %v2239 = vsub.f32 %v2207, %v2223
        %v2240 = vsub.f32 %v2208, %v2224
        %v2241 = vsub.f32 %v2209, %v2225
        %v2242 = vsub.f32 %v2210, %v2226
        %v2243 = vsub.f32 %v2211, %v2227
        %v2244 = vsub.f32 %v2212, %v2228
        %v2245 = vsub.f32 %v2213, %v2229
        %v2246 = vsub.f32 %v2214, %v2230
        %v2247 = vsub.f32 %v2215, %v2231
        %v2248 = vsub.f32 %v2216, %v2232
        %v2249 = vsub.f32 %v2217, %v2233
        %v2250 = vsub.f32 %v2218, %v2234
        %v2251 = vsub.f32 %v2219, %v2235
        %v2252 = vsub.f32 %v2220, %v2236
        %v2253 = vsub.f32 %v2221, %v2237
        %v2254 = vsub.f32 %v2222, %v2238
        %v2255 = vmul.f32 %v2239, %v1967
        %v2256 = vmul.f32 %v2240, %v1968
        %v2257 = vmul.f32 %v2241, %v1969
        %v2258 = vmul.f32 %v2242, %v1970
        %v2259 = vmul.f32 %v2243, %v1971
        %v2260 = vmul.f32 %v2244, %v1972
        %v2261 = vmul.f32 %v2245, %v1973
        %v2262 = vmul.f32 %v2246, %v1974
        %v2263 = vmul.f32 %v2247, %v1975
        %v2264 = vmul.f32 %v2248, %v1976
        %v2265 = vmul.f32 %v2249, %v1977
        %v2266 = vmul.f32 %v2250, %v1978
        %v2267 = vmul.f32 %v2251, %v1979
        %v2268 = vmul.f32 %v2252, %v1980
        %v2269 = vmul.f32 %v2253, %v1981
        %v2270 = vmul.f32 %v2254, %v1982
        %v2271 = vld [vmem:[#allocation2] sm:$0xff]
        %v2272 = vld [vmem:[#allocation2 + $0x8] sm:$0xff]
        %v2273 = vld [vmem:[#allocation2 + $0x10] sm:$0xff]
        %v2274 = vld [vmem:[#allocation2 + $0x18] sm:$0xff]
        %v2275 = vld [vmem:[#allocation2 + $0x20] sm:$0xff]
        %v2276 = vld [vmem:[#allocation2 + $0x28] sm:$0xff]
        %v2277 = vld [vmem:[#allocation2 + $0x30] sm:$0xff]
        %v2278 = vld [vmem:[#allocation2 + $0x38] sm:$0xff]
        %v2279 = vld [vmem:[#allocation2 + $0x40] sm:$0xff]
        %v2280 = vld [vmem:[#allocation2 + $0x48] sm:$0xff]
        %v2281 = vld [vmem:[#allocation2 + $0x50] sm:$0xff]
        %v2282 = vld [vmem:[#allocation2 + $0x58] sm:$0xff]
        %v2283 = vld [vmem:[#allocation2 + $0x60] sm:$0xff]
        %v2284 = vld [vmem:[#allocation2 + $0x68] sm:$0xff]
        %v2285 = vld [vmem:[#allocation2 + $0x70] sm:$0xff]
        %v2286 = vld [vmem:[#allocation2 + $0x78] sm:$0xff]
        %v2287 = vadd.f32 %v2271, %v2063
        %v2288 = vadd.f32 %v2272, %v2064
        %v2289 = vadd.f32 %v2273, %v2065
        %v2290 = vadd.f32 %v2274, %v2066
        %v2291 = vadd.f32 %v2275, %v2067
        %v2292 = vadd.f32 %v2276, %v2068
        %v2293 = vadd.f32 %v2277, %v2069
        %v2294 = vadd.f32 %v2278, %v2070
        %v2295 = vadd.f32 %v2279, %v2071
        %v2296 = vadd.f32 %v2280, %v2072
        %v2297 = vadd.f32 %v2281, %v2073
        %v2298 = vadd.f32 %v2282, %v2074
        %v2299 = vadd.f32 %v2283, %v2075
        %v2300 = vadd.f32 %v2284, %v2076
        %v2301 = vadd.f32 %v2285, %v2077
        %v2302 = vadd.f32 %v2286, %v2078
        %2303 = vst [vmem:[#allocation2] sm:$0xff] %v2287
        %2304 = vst [vmem:[#allocation2 + $0x8] sm:$0xff] %v2288
        %2305 = vst [vmem:[#allocation2 + $0x10] sm:$0xff] %v2289
        %2306 = vst [vmem:[#allocation2 + $0x18] sm:$0xff] %v2290
        %2307 = vst [vmem:[#allocation2 + $0x20] sm:$0xff] %v2291
        %2308 = vst [vmem:[#allocation2 + $0x28] sm:$0xff] %v2292
        %2309 = vst [vmem:[#allocation2 + $0x30] sm:$0xff] %v2293
        %2310 = vst [vmem:[#allocation2 + $0x38] sm:$0xff] %v2294
        %2311 = vst [vmem:[#allocation2 + $0x40] sm:$0xff] %v2295
        %2312 = vst [vmem:[#allocation2 + $0x48] sm:$0xff] %v2296
        %2313 = vst [vmem:[#allocation2 + $0x50] sm:$0xff] %v2297
        %2314 = vst [vmem:[#allocation2 + $0x58] sm:$0xff] %v2298
        %2315 = vst [vmem:[#allocation2 + $0x60] sm:$0xff] %v2299
        %2316 = vst [vmem:[#allocation2 + $0x68] sm:$0xff] %v2300
        %2317 = vst [vmem:[#allocation2 + $0x70] sm:$0xff] %v2301
        %2318 = vst [vmem:[#allocation2 + $0x78] sm:$0xff] %v2302
        %v2319 = vld [vmem:[#allocation3] sm:$0xff]
        %v2320 = vld [vmem:[#allocation3 + $0x8] sm:$0xff]
        %v2321 = vld [vmem:[#allocation3 + $0x10] sm:$0xff]
        %v2322 = vld [vmem:[#allocation3 + $0x18] sm:$0xff]
        %v2323 = vld [vmem:[#allocation3 + $0x20] sm:$0xff]
        %v2324 = vld [vmem:[#allocation3 + $0x28] sm:$0xff]
        %v2325 = vld [vmem:[#allocation3 + $0x30] sm:$0xff]
        %v2326 = vld [vmem:[#allocation3 + $0x38] sm:$0xff]
        %v2327 = vld [vmem:[#allocation3 + $0x40] sm:$0xff]
        %v2328 = vld [vmem:[#allocation3 + $0x48] sm:$0xff]
        %v2329 = vld [vmem:[#allocation3 + $0x50] sm:$0xff]
        %v2330 = vld [vmem:[#allocation3 + $0x58] sm:$0xff]
        %v2331 = vld [vmem:[#allocation3 + $0x60] sm:$0xff]
        %v2332 = vld [vmem:[#allocation3 + $0x68] sm:$0xff]
        %v2333 = vld [vmem:[#allocation3 + $0x70] sm:$0xff]
        %v2334 = vld [vmem:[#allocation3 + $0x78] sm:$0xff]
        %v2335 = vadd.f32 %v2319, %v2159
        %v2336 = vadd.f32 %v2320, %v2160
        %v2337 = vadd.f32 %v2321, %v2161
        %v2338 = vadd.f32 %v2322, %v2162
        %v2339 = vadd.f32 %v2323, %v2163
        %v2340 = vadd.f32 %v2324, %v2164
        %v2341 = vadd.f32 %v2325, %v2165
        %v2342 = vadd.f32 %v2326, %v2166
        %v2343 = vadd.f32 %v2327, %v2167
        %v2344 = vadd.f32 %v2328, %v2168
        %v2345 = vadd.f32 %v2329, %v2169
        %v2346 = vadd.f32 %v2330, %v2170
        %v2347 = vadd.f32 %v2331, %v2171
        %v2348 = vadd.f32 %v2332, %v2172
        %v2349 = vadd.f32 %v2333, %v2173
        %v2350 = vadd.f32 %v2334, %v2174
        %2351 = vst [vmem:[#allocation3] sm:$0xff] %v2335
        %2352 = vst [vmem:[#allocation3 + $0x8] sm:$0xff] %v2336
        %2353 = vst [vmem:[#allocation3 + $0x10] sm:$0xff] %v2337
        %2354 = vst [vmem:[#allocation3 + $0x18] sm:$0xff] %v2338
        %2355 = vst [vmem:[#allocation3 + $0x20] sm:$0xff] %v2339
        %2356 = vst [vmem:[#allocation3 + $0x28] sm:$0xff] %v2340
        %2357 = vst [vmem:[#allocation3 + $0x30] sm:$0xff] %v2341
        %2358 = vst [vmem:[#allocation3 + $0x38] sm:$0xff] %v2342
        %2359 = vst [vmem:[#allocation3 + $0x40] sm:$0xff] %v2343
        %2360 = vst [vmem:[#allocation3 + $0x48] sm:$0xff] %v2344
        %2361 = vst [vmem:[#allocation3 + $0x50] sm:$0xff] %v2345
        %2362 = vst [vmem:[#allocation3 + $0x58] sm:$0xff] %v2346
        %2363 = vst [vmem:[#allocation3 + $0x60] sm:$0xff] %v2347
        %2364 = vst [vmem:[#allocation3 + $0x68] sm:$0xff] %v2348
        %2365 = vst [vmem:[#allocation3 + $0x70] sm:$0xff] %v2349
        %2366 = vst [vmem:[#allocation3 + $0x78] sm:$0xff] %v2350
        %v2367 = vld [vmem:[#allocation4] sm:$0xff]
        %v2368 = vld [vmem:[#allocation4 + $0x8] sm:$0xff]
        %v2369 = vld [vmem:[#allocation4 + $0x10] sm:$0xff]
        %v2370 = vld [vmem:[#allocation4 + $0x18] sm:$0xff]
        %v2371 = vld [vmem:[#allocation4 + $0x20] sm:$0xff]
        %v2372 = vld [vmem:[#allocation4 + $0x28] sm:$0xff]
        %v2373 = vld [vmem:[#allocation4 + $0x30] sm:$0xff]
        %v2374 = vld [vmem:[#allocation4 + $0x38] sm:$0xff]
        %v2375 = vld [vmem:[#allocation4 + $0x40] sm:$0xff]
        %v2376 = vld [vmem:[#allocation4 + $0x48] sm:$0xff]
        %v2377 = vld [vmem:[#allocation4 + $0x50] sm:$0xff]
        %v2378 = vld [vmem:[#allocation4 + $0x58] sm:$0xff]
        %v2379 = vld [vmem:[#allocation4 + $0x60] sm:$0xff]
        %v2380 = vld [vmem:[#allocation4 + $0x68] sm:$0xff]
        %v2381 = vld [vmem:[#allocation4 + $0x70] sm:$0xff]
        %v2382 = vld [vmem:[#allocation4 + $0x78] sm:$0xff]
        %v2383 = vadd.f32 %v2367, %v2255
        %v2384 = vadd.f32 %v2368, %v2256
        %v2385 = vadd.f32 %v2369, %v2257
        %v2386 = vadd.f32 %v2370, %v2258
        %v2387 = vadd.f32 %v2371, %v2259
        %v2388 = vadd.f32 %v2372, %v2260
        %v2389 = vadd.f32 %v2373, %v2261
        %v2390 = vadd.f32 %v2374, %v2262
        %v2391 = vadd.f32 %v2375, %v2263
        %v2392 = vadd.f32 %v2376, %v2264
        %v2393 = vadd.f32 %v2377, %v2265
        %v2394 = vadd.f32 %v2378, %v2266
        %v2395 = vadd.f32 %v2379, %v2267
        %v2396 = vadd.f32 %v2380, %v2268
        %v2397 = vadd.f32 %v2381, %v2269
        %v2398 = vadd.f32 %v2382, %v2270
        %2399 = vst [vmem:[#allocation4] sm:$0xff] %v2383
        %2400 = vst [vmem:[#allocation4 + $0x8] sm:$0xff] %v2384
        %2401 = vst [vmem:[#allocation4 + $0x10] sm:$0xff] %v2385
        %2402 = vst [vmem:[#allocation4 + $0x18] sm:$0xff] %v2386
        %2403 = vst [vmem:[#allocation4 + $0x20] sm:$0xff] %v2387
        %2404 = vst [vmem:[#allocation4 + $0x28] sm:$0xff] %v2388
        %2405 = vst [vmem:[#allocation4 + $0x30] sm:$0xff] %v2389
        %2406 = vst [vmem:[#allocation4 + $0x38] sm:$0xff] %v2390
        %2407 = vst [vmem:[#allocation4 + $0x40] sm:$0xff] %v2391
        %2408 = vst [vmem:[#allocation4 + $0x48] sm:$0xff] %v2392
        %2409 = vst [vmem:[#allocation4 + $0x50] sm:$0xff] %v2393
        %2410 = vst [vmem:[#allocation4 + $0x58] sm:$0xff] %v2394
        %2411 = vst [vmem:[#allocation4 + $0x60] sm:$0xff] %v2395
        %2412 = vst [vmem:[#allocation4 + $0x68] sm:$0xff] %v2396
        %2413 = vst [vmem:[#allocation4 + $0x70] sm:$0xff] %v2397
        %2414 = vst [vmem:[#allocation4 + $0x78] sm:$0xff] %v2398
        %p2415 = scmp.eq.s32.totalorder %s25, 1
        // Predicated region
        $region91: #{tpu_custom_call.1} parent=77 // pred_check
          %p2416 = pneg %p2415
        $region92: #{tpu_custom_call.1} parent=77 // pred_check_branch
          %2418 = sbr.rel (%p2416) target = $region94
        $region93: #{tpu_custom_call.1} parent=77 // pred_region
          %v2419 = vld [vmem:[#allocation2] sm:$0xff]
          %v2420 = vld [vmem:[#allocation2 + $0x8] sm:$0xff]
          %v2421 = vld [vmem:[#allocation2 + $0x10] sm:$0xff]
          %v2422 = vld [vmem:[#allocation2 + $0x18] sm:$0xff]
          %v2423 = vld [vmem:[#allocation2 + $0x20] sm:$0xff]
          %v2424 = vld [vmem:[#allocation2 + $0x28] sm:$0xff]
          %v2425 = vld [vmem:[#allocation2 + $0x30] sm:$0xff]
          %v2426 = vld [vmem:[#allocation2 + $0x38] sm:$0xff]
          %v2427 = vld [vmem:[#allocation2 + $0x40] sm:$0xff]
          %v2428 = vld [vmem:[#allocation2 + $0x48] sm:$0xff]
          %v2429 = vld [vmem:[#allocation2 + $0x50] sm:$0xff]
          %v2430 = vld [vmem:[#allocation2 + $0x58] sm:$0xff]
          %v2431 = vld [vmem:[#allocation2 + $0x60] sm:$0xff]
          %v2432 = vld [vmem:[#allocation2 + $0x68] sm:$0xff]
          %v2433 = vld [vmem:[#allocation2 + $0x70] sm:$0xff]
          %v2434 = vld [vmem:[#allocation2 + $0x78] sm:$0xff]
          %2435 = vadd.xlane.f32.xlu0 %v2419
          %v2436 = vpop.xlane.xlu0 %2435
          %2437 = vadd.xlane.f32.xlu0 %v2420
          %v2438 = vpop.xlane.xlu0 %2437
          %2439 = vadd.xlane.f32.xlu0 %v2421
          %v2440 = vpop.xlane.xlu0 %2439
          %2441 = vadd.xlane.f32.xlu0 %v2422
          %v2442 = vpop.xlane.xlu0 %2441
          %2443 = vadd.xlane.f32.xlu0 %v2423
          %v2444 = vpop.xlane.xlu0 %2443
          %2445 = vadd.xlane.f32.xlu0 %v2424
          %v2446 = vpop.xlane.xlu0 %2445
          %2447 = vadd.xlane.f32.xlu0 %v2425
          %v2448 = vpop.xlane.xlu0 %2447
          %2449 = vadd.xlane.f32.xlu0 %v2426
          %v2450 = vpop.xlane.xlu0 %2449
          %2451 = vadd.xlane.f32.xlu0 %v2427
          %v2452 = vpop.xlane.xlu0 %2451
          %2453 = vadd.xlane.f32.xlu0 %v2428
          %v2454 = vpop.xlane.xlu0 %2453
          %2455 = vadd.xlane.f32.xlu0 %v2429
          %v2456 = vpop.xlane.xlu0 %2455
          %2457 = vadd.xlane.f32.xlu0 %v2430
          %v2458 = vpop.xlane.xlu0 %2457
          %2459 = vadd.xlane.f32.xlu0 %v2431
          %v2460 = vpop.xlane.xlu0 %2459
          %2461 = vadd.xlane.f32.xlu0 %v2432
          %v2462 = vpop.xlane.xlu0 %2461
          %2463 = vadd.xlane.f32.xlu0 %v2433
          %v2464 = vpop.xlane.xlu0 %2463
          %2465 = vadd.xlane.f32.xlu0 %v2434
          %v2466 = vpop.xlane.xlu0 %2465
          %vm2467 = vcmask 7168
          %2468 = vst.msk [vmem:[%s486] sm:$0xff] %vm2467, %v2436
          %2469 = vst.msk [vmem:[%s486 + $0x8] sm:$0xff] %vm2467, %v2438
          %2470 = vst.msk [vmem:[%s486 + $0x10] sm:$0xff] %vm2467, %v2440
          %2471 = vst.msk [vmem:[%s486 + $0x18] sm:$0xff] %vm2467, %v2442
          %2472 = vst.msk [vmem:[%s486 + $0x20] sm:$0xff] %vm2467, %v2444
          %2473 = vst.msk [vmem:[%s486 + $0x28] sm:$0xff] %vm2467, %v2446
          %2474 = vst.msk [vmem:[%s486 + $0x30] sm:$0xff] %vm2467, %v2448
          %2475 = vst.msk [vmem:[%s486 + $0x38] sm:$0xff] %vm2467, %v2450
          %2476 = vst.msk [vmem:[%s486 + $0x40] sm:$0xff] %vm2467, %v2452
          %2477 = vst.msk [vmem:[%s486 + $0x48] sm:$0xff] %vm2467, %v2454
          %2478 = vst.msk [vmem:[%s486 + $0x50] sm:$0xff] %vm2467, %v2456
          %2479 = vst.msk [vmem:[%s486 + $0x58] sm:$0xff] %vm2467, %v2458
          %2480 = vst.msk [vmem:[%s486 + $0x60] sm:$0xff] %vm2467, %v2460
          %2481 = vst.msk [vmem:[%s486 + $0x68] sm:$0xff] %vm2467, %v2462
          %2482 = vst.msk [vmem:[%s486 + $0x70] sm:$0xff] %vm2467, %v2464
          %2483 = vst.msk [vmem:[%s486 + $0x78] sm:$0xff] %vm2467, %v2466
          %v2484 = vld [vmem:[#allocation3] sm:$0xff]
          %v2485 = vld [vmem:[#allocation3 + $0x8] sm:$0xff]
          %v2486 = vld [vmem:[#allocation3 + $0x10] sm:$0xff]
          %v2487 = vld [vmem:[#allocation3 + $0x18] sm:$0xff]
          %v2488 = vld [vmem:[#allocation3 + $0x20] sm:$0xff]
          %v2489 = vld [vmem:[#allocation3 + $0x28] sm:$0xff]
          %v2490 = vld [vmem:[#allocation3 + $0x30] sm:$0xff]
          %v2491 = vld [vmem:[#allocation3 + $0x38] sm:$0xff]
          %v2492 = vld [vmem:[#allocation3 + $0x40] sm:$0xff]
          %v2493 = vld [vmem:[#allocation3 + $0x48] sm:$0xff]
          %v2494 = vld [vmem:[#allocation3 + $0x50] sm:$0xff]
          %v2495 = vld [vmem:[#allocation3 + $0x58] sm:$0xff]
          %v2496 = vld [vmem:[#allocation3 + $0x60] sm:$0xff]
          %v2497 = vld [vmem:[#allocation3 + $0x68] sm:$0xff]
          %v2498 = vld [vmem:[#allocation3 + $0x70] sm:$0xff]
          %v2499 = vld [vmem:[#allocation3 + $0x78] sm:$0xff]
          %2500 = vadd.xlane.f32.xlu0 %v2484
          %v2501 = vpop.xlane.xlu0 %2500
          %2502 = vadd.xlane.f32.xlu0 %v2485
          %v2503 = vpop.xlane.xlu0 %2502
          %2504 = vadd.xlane.f32.xlu0 %v2486
          %v2505 = vpop.xlane.xlu0 %2504
          %2506 = vadd.xlane.f32.xlu0 %v2487
          %v2507 = vpop.xlane.xlu0 %2506
          %2508 = vadd.xlane.f32.xlu0 %v2488
          %v2509 = vpop.xlane.xlu0 %2508
          %2510 = vadd.xlane.f32.xlu0 %v2489
          %v2511 = vpop.xlane.xlu0 %2510
          %2512 = vadd.xlane.f32.xlu0 %v2490
          %v2513 = vpop.xlane.xlu0 %2512
          %2514 = vadd.xlane.f32.xlu0 %v2491
          %v2515 = vpop.xlane.xlu0 %2514
          %2516 = vadd.xlane.f32.xlu0 %v2492
          %v2517 = vpop.xlane.xlu0 %2516
          %2518 = vadd.xlane.f32.xlu0 %v2493
          %v2519 = vpop.xlane.xlu0 %2518
          %2520 = vadd.xlane.f32.xlu0 %v2494
          %v2521 = vpop.xlane.xlu0 %2520
          %2522 = vadd.xlane.f32.xlu0 %v2495
          %v2523 = vpop.xlane.xlu0 %2522
          %2524 = vadd.xlane.f32.xlu0 %v2496
          %v2525 = vpop.xlane.xlu0 %2524
          %2526 = vadd.xlane.f32.xlu0 %v2497
          %v2527 = vpop.xlane.xlu0 %2526
          %2528 = vadd.xlane.f32.xlu0 %v2498
          %v2529 = vpop.xlane.xlu0 %2528
          %2530 = vadd.xlane.f32.xlu0 %v2499
          %v2531 = vpop.xlane.xlu0 %2530
          %vm2532 = vcmask 15368
          %2533 = vst.msk [vmem:[%s486] sm:$0xff] %vm2532, %v2501
          %2534 = vst.msk [vmem:[%s486 + $0x8] sm:$0xff] %vm2532, %v2503
          %2535 = vst.msk [vmem:[%s486 + $0x10] sm:$0xff] %vm2532, %v2505
          %2536 = vst.msk [vmem:[%s486 + $0x18] sm:$0xff] %vm2532, %v2507
          %2537 = vst.msk [vmem:[%s486 + $0x20] sm:$0xff] %vm2532, %v2509
          %2538 = vst.msk [vmem:[%s486 + $0x28] sm:$0xff] %vm2532, %v2511
          %2539 = vst.msk [vmem:[%s486 + $0x30] sm:$0xff] %vm2532, %v2513
          %2540 = vst.msk [vmem:[%s486 + $0x38] sm:$0xff] %vm2532, %v2515
          %2541 = vst.msk [vmem:[%s486 + $0x40] sm:$0xff] %vm2532, %v2517
          %2542 = vst.msk [vmem:[%s486 + $0x48] sm:$0xff] %vm2532, %v2519
          %2543 = vst.msk [vmem:[%s486 + $0x50] sm:$0xff] %vm2532, %v2521
          %2544 = vst.msk [vmem:[%s486 + $0x58] sm:$0xff] %vm2532, %v2523
          %2545 = vst.msk [vmem:[%s486 + $0x60] sm:$0xff] %vm2532, %v2525
          %2546 = vst.msk [vmem:[%s486 + $0x68] sm:$0xff] %vm2532, %v2527
          %2547 = vst.msk [vmem:[%s486 + $0x70] sm:$0xff] %vm2532, %v2529
          %2548 = vst.msk [vmem:[%s486 + $0x78] sm:$0xff] %vm2532, %v2531
          %v2549 = vld [vmem:[#allocation4] sm:$0xff]
          %v2550 = vld [vmem:[#allocation4 + $0x8] sm:$0xff]
          %v2551 = vld [vmem:[#allocation4 + $0x10] sm:$0xff]
          %v2552 = vld [vmem:[#allocation4 + $0x18] sm:$0xff]
          %v2553 = vld [vmem:[#allocation4 + $0x20] sm:$0xff]
          %v2554 = vld [vmem:[#allocation4 + $0x28] sm:$0xff]
          %v2555 = vld [vmem:[#allocation4 + $0x30] sm:$0xff]
          %v2556 = vld [vmem:[#allocation4 + $0x38] sm:$0xff]
          %v2557 = vld [vmem:[#allocation4 + $0x40] sm:$0xff]
          %v2558 = vld [vmem:[#allocation4 + $0x48] sm:$0xff]
          %v2559 = vld [vmem:[#allocation4 + $0x50] sm:$0xff]
          %v2560 = vld [vmem:[#allocation4 + $0x58] sm:$0xff]
          %v2561 = vld [vmem:[#allocation4 + $0x60] sm:$0xff]
          %v2562 = vld [vmem:[#allocation4 + $0x68] sm:$0xff]
          %v2563 = vld [vmem:[#allocation4 + $0x70] sm:$0xff]
          %v2564 = vld [vmem:[#allocation4 + $0x78] sm:$0xff]
          %2565 = vadd.xlane.f32.xlu0 %v2549
          %v2566 = vpop.xlane.xlu0 %2565
          %2567 = vadd.xlane.f32.xlu0 %v2550
          %v2568 = vpop.xlane.xlu0 %2567
          %2569 = vadd.xlane.f32.xlu0 %v2551
          %v2570 = vpop.xlane.xlu0 %2569
          %2571 = vadd.xlane.f32.xlu0 %v2552
          %v2572 = vpop.xlane.xlu0 %2571
          %2573 = vadd.xlane.f32.xlu0 %v2553
          %v2574 = vpop.xlane.xlu0 %2573
          %2575 = vadd.xlane.f32.xlu0 %v2554
          %v2576 = vpop.xlane.xlu0 %2575
          %2577 = vadd.xlane.f32.xlu0 %v2555
          %v2578 = vpop.xlane.xlu0 %2577
          %2579 = vadd.xlane.f32.xlu0 %v2556
          %v2580 = vpop.xlane.xlu0 %2579
          %2581 = vadd.xlane.f32.xlu0 %v2557
          %v2582 = vpop.xlane.xlu0 %2581
          %2583 = vadd.xlane.f32.xlu0 %v2558
          %v2584 = vpop.xlane.xlu0 %2583
          %2585 = vadd.xlane.f32.xlu0 %v2559
          %v2586 = vpop.xlane.xlu0 %2585
          %2587 = vadd.xlane.f32.xlu0 %v2560
          %v2588 = vpop.xlane.xlu0 %2587
          %2589 = vadd.xlane.f32.xlu0 %v2561
          %v2590 = vpop.xlane.xlu0 %2589
          %2591 = vadd.xlane.f32.xlu0 %v2562
          %v2592 = vpop.xlane.xlu0 %2591
          %2593 = vadd.xlane.f32.xlu0 %v2563
          %v2594 = vpop.xlane.xlu0 %2593
          %2595 = vadd.xlane.f32.xlu0 %v2564
          %v2596 = vpop.xlane.xlu0 %2595
          %vm2597 = vcmask 23568
          %2598 = vst.msk [vmem:[%s486] sm:$0xff] %vm2597, %v2566
          %2599 = vst.msk [vmem:[%s486 + $0x8] sm:$0xff] %vm2597, %v2568
          %2600 = vst.msk [vmem:[%s486 + $0x10] sm:$0xff] %vm2597, %v2570
          %2601 = vst.msk [vmem:[%s486 + $0x18] sm:$0xff] %vm2597, %v2572
          %2602 = vst.msk [vmem:[%s486 + $0x20] sm:$0xff] %vm2597, %v2574
          %2603 = vst.msk [vmem:[%s486 + $0x28] sm:$0xff] %vm2597, %v2576
          %2604 = vst.msk [vmem:[%s486 + $0x30] sm:$0xff] %vm2597, %v2578
          %2605 = vst.msk [vmem:[%s486 + $0x38] sm:$0xff] %vm2597, %v2580
          %2606 = vst.msk [vmem:[%s486 + $0x40] sm:$0xff] %vm2597, %v2582
          %2607 = vst.msk [vmem:[%s486 + $0x48] sm:$0xff] %vm2597, %v2584
          %2608 = vst.msk [vmem:[%s486 + $0x50] sm:$0xff] %vm2597, %v2586
          %2609 = vst.msk [vmem:[%s486 + $0x58] sm:$0xff] %vm2597, %v2588
          %2610 = vst.msk [vmem:[%s486 + $0x60] sm:$0xff] %vm2597, %v2590
          %2611 = vst.msk [vmem:[%s486 + $0x68] sm:$0xff] %vm2597, %v2592
          %2612 = vst.msk [vmem:[%s486 + $0x70] sm:$0xff] %vm2597, %v2594
          %2613 = vst.msk [vmem:[%s486 + $0x78] sm:$0xff] %vm2597, %v2596
        $region94: #{tpu_custom_call.1} parent=77 // pred_fallthru
          _
        %s2614 = smul.u32 16, %s24
        %p2615 = scmp.lt.s32.totalorder %s2614, 31
        %s2616 = scalar_select %p2615, %s2614, 31
        %s2617 = smul.addr %s2616, 8
        %s2618 = scalar_lea.vmem %s6, %s2617
        // Predicated region
        $region95: #{tpu_custom_call.1} parent=77 // pred_check
          %p2619 = pneg %p210
        $region96: #{tpu_custom_call.1} parent=77 // pred_check_branch
          %2621 = sbr.rel (%p2619) target = $region98
        $region97: #{tpu_custom_call.1} parent=77 // pred_region
          %s2622 = smul.u32 16, %s24
        $region98: #{tpu_custom_call.1} parent=77 // pred_fallthru
          _
      $region78: #{tpu_custom_call.1} parent=5 // pred_fallthru
        _
      %p2623 = scmp.le.s32.totalorder 2, %s15
      // Predicated region
      $region99: #{tpu_custom_call.1} parent=5 // pred_check
        %p2624 = pneg %p2623
      $region100: #{tpu_custom_call.1} parent=5 // pred_check_branch
        %2626 = sbr.rel (%p2624) target = $region102
      $region101: #{tpu_custom_call.1} parent=5 // pred_region
        %s2627 = ssub.s32 %s15, 2
        // Predicated region
        $region103: #{tpu_custom_call.1} parent=101 // pred_check
          %p2628 = pneg %p216
        $region104: #{tpu_custom_call.1} parent=101 // pred_check_branch
          %2630 = sbr.rel (%p2628) target = $region106
        $region105: #{tpu_custom_call.1} parent=101 // pred_region
          %s2631 = smul.u32 16, %s26
          %p2632 = scmp.lt.s32.totalorder %s2631, 31
          %s2633 = scalar_select %p2632, %s2631, 31
          %s2634 = smul.addr %s2633, 8
          %s2635 = scalar_lea.vmem %s6, %s2634
        $region106: #{tpu_custom_call.1} parent=101 // pred_fallthru
          _
      $region102: #{tpu_custom_call.1} parent=5 // pred_fallthru
        _
    $region6: #{tpu_custom_call.1} parent=1 // loop_footer
      %s19 = sadd.s32 1, %s15
    $region7: #{tpu_custom_call.1} parent=1 // loop_footer_branch
      %14 = sbr.rel target = $region3
    $region8: #{tpu_custom_call.1} parent=1 // loop_exit
      _
    %2636 = vsyncpa [#allocation7], 1
    %s2637 = scalar_lea.sflag [#allocation7], 1
    %2638 = vsyncpa %s2637, 1

</llo_original>
